<compile_context>
chip_gen: v5e
topology: v5e:2x2
jax: 0.10.0
libtpu: 0.0.40
codegen_flags: <defaults>
</compile_context>

<pallas_src>
import math
import jax
import jax.numpy as jnp
from jax.experimental import pallas as pl
from jax.experimental.pallas import tpu as pltpu


# ---------------------------------------------------------------------------
# Fused kernel: whole latent chain (all blocks) for one (batch, spatial) tile.
# Grid = (B, n_s_tiles, num_blocks); the block axis is innermost ("arbitrary")
# so the z scratch carries correctly from block k to block k+1.
# ---------------------------------------------------------------------------
def fused_latent_chain_kernel(d_ref, mup_ref, sigp_ref, eps_ref,
                              wd_ref, wz_ref, wh_ref, wo_ref, b_ref,
                              z_ref, mu_ref, sig_ref, z_scr):
    blk = pl.program_id(2)
    L = z_scr.shape[0]
    M = wh_ref.shape[-1]

    # First (deepest) block has no latent input: start the carried z at zero.
    @pl.when(blk == 0)
    def _():
        z_scr[...] = jnp.zeros_like(z_scr)

    # Packed biases: [b_in (M) | b_h (M) | b_o (2L)] as a column slab.
    b_all = b_ref[0]                 # (2M + 2L, 1)
    b_in = b_all[:M]
    b_h = b_all[M:2 * M]
    b_o = b_all[2 * M:]

    x = d_ref[0, 0]                  # (Ch, S_t)

    # enc_in: 1x1 conv over cat((d, z_prev), dim=1), expressed as split matmuls.
    h = (jnp.dot(wd_ref[0], x, preferred_element_type=jnp.float32)
         + jnp.dot(wz_ref[0], z_scr[...], preferred_element_type=jnp.float32)
         + b_in)

    # enc_hidden[0] (conv) + enc_hidden[1] (ReLU) -- the only pair forward runs.
    h = jnp.maximum(
        jnp.dot(wh_ref[0], h, preferred_element_type=jnp.float32) + b_h, 0.0)

    # enc_out_1 / enc_out_2 fused into one (2L, M) matmul, clipped at 10.
    o = jnp.minimum(
        jnp.dot(wo_ref[0], h, preferred_element_type=jnp.float32) + b_o, 10.0)
    mu_hat = o[:L]                   # (L, S_t)
    logsig_hat = o[L:]               # (L, S_t)

    # Posterior combine + reparameterize.
    sigma_q_hat = jnp.exp(logsig_hat) + 0.001
    inv2_q = 1.0 / (sigma_q_hat * sigma_q_hat)
    sp = sigp_ref[0, 0]
    inv2_p = 1.0 / (sp * sp)
    sigma_q = 1.0 / (inv2_q + inv2_p + 0.001)
    mu_q = sigma_q * (mu_hat * inv2_q + mup_ref[0, 0] * inv2_p)
    z = mu_q + eps_ref[0, 0] * sigma_q

    # Carry z to the next block (stays resident in VMEM) and emit outputs.
    z_scr[...] = z
    z_ref[0, 0] = z
    mu_ref[0, 0] = mu_q
    sig_ref[0, 0] = sigma_q


# ---------------------------------------------------------------------------
# Parameter construction / stacking
# ---------------------------------------------------------------------------
def _conv1x1_params(key, c_in, c_out):
    """PyTorch Conv2d(c_in, c_out, 1) default init, stored as (c_in, c_out) + (1, c_out)."""
    kw, kb = jax.random.split(key)
    bound = 1.0 / math.sqrt(c_in)
    w = jax.random.uniform(kw, (c_in, c_out), jnp.float32, -bound, bound)
    b = jax.random.uniform(kb, (1, c_out), jnp.float32, -bound, bound)
    return w, b


def init_inference_params(key, hidden_channels, latent_channels, num_blocks):
    params = []
    for blk in range(num_blocks):
        lat_in = latent_channels if blk < num_blocks - 1 else 0
        c_in = hidden_channels + lat_in
        mid = latent_channels
        lat_out = latent_channels
        key, k0, k1, k2, k3, k4 = jax.random.split(key, 6)
        w_in, b_in = _conv1x1_params(k0, c_in, mid)
        w_h, b_h = _conv1x1_params(k1, mid, mid)        # enc_hidden[0]
        _wh2, _bh2 = _conv1x1_params(k2, mid, mid)      # enc_hidden[2] -- unused in forward
        w_o1, b_o1 = _conv1x1_params(k3, mid, lat_out)
        w_o2, b_o2 = _conv1x1_params(k4, mid, lat_out)
        params.append(dict(w_in=w_in, b_in=b_in, w_h=w_h, b_h=b_h,
                           w_o1=w_o1, b_o1=b_o1, w_o2=w_o2, b_o2=b_o2))
    return params


def stack_params_for_kernel(params, hidden_channels, latent_channels):
    """Stack per-block params into (num_blocks, ...) arrays in processing order
    (deepest block first), transposed for channels-first matmuls, splitting
    enc_in into its d-part and z-part, packing the two output heads into one
    (2L, M) matrix and all biases into one column slab."""
    num_blocks = len(params)
    L = latent_channels
    order = list(range(num_blocks))[::-1]   # processing order: deepest first
    wd, wz, wh, wo, b_all = [], [], [], [], []
    for i in order:
        p = params[i]
        w_in = p["w_in"]                    # (c_in, M)
        M = w_in.shape[1]
        if w_in.shape[0] == hidden_channels:        # deepest block: no z input
            wd_i = w_in
            wz_i = jnp.zeros((L, M), jnp.float32)
        else:                                       # cat((d, z), dim=1): d rows first
            wd_i = w_in[:hidden_channels]
            wz_i = w_in[hidden_channels:]
        wd.append(wd_i.T)                                   # (M, Ch)
        wz.append(wz_i.T)                                   # (M, L)
        wh.append(p["w_h"].T)                               # (M, M)
        wo.append(jnp.concatenate([p["w_o1"], p["w_o2"]], axis=1).T)   # (2L, M)
        b_all.append(jnp.concatenate(
            [p["b_in"], p["b_h"], p["b_o1"], p["b_o2"]], axis=1).reshape(-1, 1))
    return dict(wd=jnp.stack(wd), wz=jnp.stack(wz), wh=jnp.stack(wh),
                wo=jnp.stack(wo), b=jnp.stack(b_all))


# ---------------------------------------------------------------------------
# Forward wrapper
# ---------------------------------------------------------------------------
def inference_model_forward(d, mu_p, sigma_p, params, eps_all, *, tile_s=None):
    """
    d:        (num_blocks, B, hidden, H, W)   -- deterministic hidden states (module order)
    mu_p:     (num_blocks, B, latent, H, W)   -- prior means (module order)
    sigma_p:  (num_blocks, B, latent, H, W)   -- prior stds, positive (module order)
    eps_all:  (num_blocks, B, latent, H, W)   -- noise in PROCESSING order
              (eps_all[0] for the deepest block).
    Returns (z, mus, sigmas), each (num_blocks, B, latent, H, W), stacked in the
    same order as the PyTorch code (index 0 == deepest/last block).
    """
    num_blocks, B, Ch, H, W = d.shape
    L = mu_p.shape[2]
    M = params[0]["w_h"].shape[0]
    S = H * W

    if tile_s is None:
        tile_s = S                       # whole spatial slab per step (tiny working set)
    assert S % tile_s == 0
    assert tile_s == S or tile_s % 128 == 0
    n_s = S // tile_s

    # Free reshapes only: data stays in its native NCHW order.
    d3 = d.reshape(num_blocks, B, Ch, S)
    mp3 = mu_p.reshape(num_blocks, B, L, S)
    sp3 = sigma_p.reshape(num_blocks, B, L, S)
    eps3 = eps_all.reshape(num_blocks, B, L, S)

    st = stack_params_for_kernel(params, Ch, L)

    nb = num_blocks
    # Module-order arrays are reversed into processing order by the index_map
    # (deepest block first); eps / weights / outputs are already in processing order.
    rev_blk = lambda b, s, k: (nb - 1 - k, b, 0, s)
    fwd_blk = lambda b, s, k: (k, b, 0, s)
    wgt_blk = lambda b, s, k: (k, 0, 0)

    out_shape = (
        jax.ShapeDtypeStruct((nb, B, L, S), jnp.float32),   # z
        jax.ShapeDtypeStruct((nb, B, L, S), jnp.float32),   # mu_q
        jax.ShapeDtypeStruct((nb, B, L, S), jnp.float32),   # sigma_q
    )

    z3, mu3, sig3 = pl.pallas_call(
        fused_latent_chain_kernel,
        out_shape=out_shape,
        grid_spec=pltpu.PrefetchScalarGridSpec(
            num_scalar_prefetch=0,
            grid=(B, n_s, num_blocks),
            in_specs=[
                pl.BlockSpec((1, 1, Ch, tile_s), rev_blk),       # d
                pl.BlockSpec((1, 1, L, tile_s), rev_blk),        # mu_p
                pl.BlockSpec((1, 1, L, tile_s), rev_blk),        # sigma_p
                pl.BlockSpec((1, 1, L, tile_s), fwd_blk),        # eps
                pl.BlockSpec((1, M, Ch), wgt_blk),               # W_d^T
                pl.BlockSpec((1, M, L), wgt_blk),                # W_z^T
                pl.BlockSpec((1, M, M), wgt_blk),                # W_h^T
                pl.BlockSpec((1, 2 * L, M), wgt_blk),            # W_o^T (o1|o2)
                pl.BlockSpec((1, 2 * M + 2 * L, 1), wgt_blk),    # packed biases
            ],
            out_specs=[
                pl.BlockSpec((1, 1, L, tile_s), fwd_blk),        # z
                pl.BlockSpec((1, 1, L, tile_s), fwd_blk),        # mu_q
                pl.BlockSpec((1, 1, L, tile_s), fwd_blk),        # sigma_q
            ],
            scratch_shapes=[pltpu.VMEM((L, tile_s), jnp.float32)],   # carried z
        ),
        compiler_params=pltpu.CompilerParams(
            dimension_semantics=("parallel", "parallel", "arbitrary")),
    )(d3, mp3, sp3, eps3,
      st["wd"], st["wz"], st["wh"], st["wo"], st["b"])

    to5 = lambda t: t.reshape(nb, B, L, H, W)   # free reshape
    return to5(z3), to5(mu3), to5(sig3)


# ---------------------------------------------------------------------------
# Pure-JAX reference (for correctness check only)
# ---------------------------------------------------------------------------
def _ref_forward(d, mu_p, sigma_p, params, eps_all):
    nb, B, Ch, H, W = d.shape
    L = mu_p.shape[2]
    S = H * W
    to3 = lambda t: t.reshape(t.shape[0], t.shape[1], S)     # (B,C,H,W)->(B,C,S)

    def conv(w, b, x):   # w (cin, cout), b (1, cout), x (B, cin, S)
        return jnp.einsum('cm,bcs->bms', w, x) + b.reshape(1, -1, 1)

    def block(x, p, mp, sp, eps):
        h = conv(p["w_in"], p["b_in"], x)
        h = jnp.maximum(conv(p["w_h"], p["b_h"], h), 0.0)
        mu_hat = jnp.minimum(conv(p["w_o1"], p["b_o1"], h), 10.0)
        ls_hat = jnp.minimum(conv(p["w_o2"], p["b_o2"], h), 10.0)
        sq_hat = jnp.exp(ls_hat) + 0.001
        i2q = sq_hat ** -2.0
        i2p = sp ** -2.0
        sq = 1.0 / (i2q + i2p + 0.001)
        mq = sq * (mu_hat * i2q + mp * i2p)
        return mq + eps * sq, mq, sq

    zs, mus, sigs = [], [], []
    z2, m2, s2 = block(to3(d[-1]), params[-1], to3(mu_p[-1]), to3(sigma_p[-1]),
                       to3(eps_all[0]))
    zs.append(z2); mus.append(m2); sigs.append(s2)
    step = 1
    for i in reversed(range(nb - 1)):
        x = jnp.concatenate([to3(d[i]), zs[-1]], axis=1)
        z2, m2, s2 = block(x, params[i], to3(mu_p[i]), to3(sigma_p[i]),
                           to3(eps_all[step]))
        zs.append(z2); mus.append(m2); sigs.append(s2)
        step += 1
    to5 = lambda t: t.reshape(B, L, H, W)
    return (jnp.stack([to5(t) for t in zs]),
            jnp.stack([to5(t) for t in mus]),
            jnp.stack([to5(t) for t in sigs]))


if __name__ == "__main__":
    key = jax.random.PRNGKey(0)

    hidden_channels = 32
    latent_channels = 16
    num_blocks = 4
    B, H, W = 2, 4, 8

    key, kp, kd, kmu, ksig, keps = jax.random.split(key, 6)
    params = init_inference_params(kp, hidden_channels, latent_channels, num_blocks)

    d = jax.random.normal(kd, (num_blocks, B, hidden_channels, H, W), jnp.float32)
    mu_p = jax.random.normal(kmu, (num_blocks, B, latent_channels, H, W), jnp.float32)
    # priors' sigma must be positive (it comes from exp(.)+1e-3 in the generative model)
    sigma_p = jnp.exp(0.1 * jax.random.normal(
        ksig, (num_blocks, B, latent_channels, H, W), jnp.float32)) + 0.001
    # TODO(synk): torch.randn_like noise is supplied externally (eps_all) instead of
    # being drawn inside the kernel, so results are reproducible.
    eps_all = jax.random.normal(keps, (num_blocks, B, latent_channels, H, W), jnp.float32)

    z, mus, sigmas = inference_model_forward(d, mu_p, sigma_p, params, eps_all)
    jax.block_until_ready((z, mus, sigmas))

    z_r, mus_r, sigmas_r = _ref_forward(d, mu_p, sigma_p, params, eps_all)
    assert z.shape == (num_blocks, B, latent_channels, H, W)
    assert jnp.allclose(z, z_r, atol=1e-4, rtol=1e-4)
    assert jnp.allclose(mus, mus_r, atol=1e-4, rtol=1e-4)
    assert jnp.allclose(sigmas, sigmas_r, atol=1e-4, rtol=1e-4)

    print("KERNEL_OK")
</pallas_src>

<mosaic_0001>
module attributes {stable_mosaic.version = 11 : i64} {
  func.func @fused_latent_chain_kernel(%arg0: i32, %arg1: i32, %arg2: i32, %arg3: memref<1x1x32x32xf32, #tpu.memory_space<vmem>>, %arg4: memref<1x1x16x32xf32, #tpu.memory_space<vmem>>, %arg5: memref<1x1x16x32xf32, #tpu.memory_space<vmem>>, %arg6: memref<1x1x16x32xf32, #tpu.memory_space<vmem>>, %arg7: memref<1x16x32xf32, #tpu.memory_space<vmem>>, %arg8: memref<1x16x16xf32, #tpu.memory_space<vmem>>, %arg9: memref<1x16x16xf32, #tpu.memory_space<vmem>>, %arg10: memref<1x32x16xf32, #tpu.memory_space<vmem>>, %arg11: memref<1x64x1xf32, #tpu.memory_space<vmem>>, %arg12: memref<1x1x16x32xf32, #tpu.memory_space<vmem>>, %arg13: memref<1x1x16x32xf32, #tpu.memory_space<vmem>>, %arg14: memref<1x1x16x32xf32, #tpu.memory_space<vmem>>, %arg15: memref<16x32xf32, #tpu.memory_space<vmem>>) attributes {dimension_semantics = [#tpu.dimension_semantics<parallel>, #tpu.dimension_semantics<parallel>, #tpu.dimension_semantics<arbitrary>], iteration_bounds = array<i64: 2, 1, 4>, scalar_prefetch = 0 : i64, scratch_operands = 1 : i64, tpu.core_type = #tpu.core_type<tc>, window_params = [{transform_indices = @transform_0, window_bounds = array<i64: 1, 1, 32, 32>}, {transform_indices = @transform_1, window_bounds = array<i64: 1, 1, 16, 32>}, {transform_indices = @transform_2, window_bounds = array<i64: 1, 1, 16, 32>}, {transform_indices = @transform_3, window_bounds = array<i64: 1, 1, 16, 32>}, {transform_indices = @transform_4, window_bounds = array<i64: 1, 16, 32>}, {transform_indices = @transform_5, window_bounds = array<i64: 1, 16, 16>}, {transform_indices = @transform_6, window_bounds = array<i64: 1, 16, 16>}, {transform_indices = @transform_7, window_bounds = array<i64: 1, 32, 16>}, {transform_indices = @transform_8, window_bounds = array<i64: 1, 64, 1>}, {transform_indices = @transform_9, window_bounds = array<i64: 1, 1, 16, 32>}, {transform_indices = @transform_10, window_bounds = array<i64: 1, 1, 16, 32>}, {transform_indices = @transform_11, window_bounds = array<i64: 1, 1, 16, 32>}]} {
    %c0_i32 = arith.constant 0 : i32
    %0 = arith.cmpi eq, %arg2, %c0_i32 : i32
    %1 = arith.extui %0 : i1 to i32
    %c0_i32_0 = arith.constant 0 : i32
    %2 = arith.cmpi ne, %1, %c0_i32_0 : i32
    scf.if %2 {
      %cst_57 = arith.constant 0.000000e+00 : f32
      %72 = vector.broadcast %cst_57 : f32 to vector<16x32xf32>
      %c0_58 = arith.constant 0 : index
      %c0_59 = arith.constant 0 : index
      %73 = vector.load %arg15[%c0_58, %c0_59] : memref<16x32xf32, #tpu.memory_space<vmem>>, vector<16x32xf32>
      tpu.vector_store %arg15[%c0_58, %c0_59], %72 {strides = array<i32>} : memref<16x32xf32, #tpu.memory_space<vmem>>, vector<16x32xf32>,
    } else {
    }
    %c0 = arith.constant 0 : index
    %c0_1 = arith.constant 0 : index
    %c0_2 = arith.constant 0 : index
    %3 = vector.load %arg11[%c0, %c0_1, %c0_2] : memref<1x64x1xf32, #tpu.memory_space<vmem>>, vector<1x64x1xf32>
    %4 = vector.shape_cast %3 : vector<1x64x1xf32> to vector<64x1xf32>
    %5 = vector.extract_strided_slice %4 {offsets = [0, 0], sizes = [16, 1], strides = [1, 1]} : vector<64x1xf32> to vector<16x1xf32>
    %6 = vector.extract_strided_slice %4 {offsets = [16, 0], sizes = [16, 1], strides = [1, 1]} : vector<64x1xf32> to vector<16x1xf32>
    %7 = vector.extract_strided_slice %4 {offsets = [32, 0], sizes = [32, 1], strides = [1, 1]} : vector<64x1xf32> to vector<32x1xf32>
    %c0_3 = arith.constant 0 : index
    %c0_4 = arith.constant 0 : index
    %c0_5 = arith.constant 0 : index
    %c0_6 = arith.constant 0 : index
    %8 = vector.load %arg3[%c0_3, %c0_4, %c0_5, %c0_6] : memref<1x1x32x32xf32, #tpu.memory_space<vmem>>, vector<1x1x32x32xf32>
    %9 = vector.shape_cast %8 : vector<1x1x32x32xf32> to vector<32x32xf32>
    %c0_7 = arith.constant 0 : index
    %c0_8 = arith.constant 0 : index
    %c0_9 = arith.constant 0 : index
    %10 = vector.load %arg7[%c0_7, %c0_8, %c0_9] : memref<1x16x32xf32, #tpu.memory_space<vmem>>, vector<1x16x32xf32>
    %11 = vector.shape_cast %10 : vector<1x16x32xf32> to vector<16x32xf32>
    %cst = arith.constant dense<0.000000e+00> : vector<16x32xf32>
    %12 = tpu.matmul %11, %9, %cst {dimension_numbers = #tpu.dot_dimension_numbers<[1], [0], [0], [1], [0, 0, 1, 1], [], []>} : vector<16x32xf32>, vector<32x32xf32>, vector<16x32xf32> -> vector<16x32xf32>
    %c0_10 = arith.constant 0 : index
    %c0_11 = arith.constant 0 : index
    %c0_12 = arith.constant 0 : index
    %13 = vector.load %arg8[%c0_10, %c0_11, %c0_12] : memref<1x16x16xf32, #tpu.memory_space<vmem>>, vector<1x16x16xf32>
    %14 = vector.shape_cast %13 : vector<1x16x16xf32> to vector<16x16xf32>
    %c0_13 = arith.constant 0 : index
    %c0_14 = arith.constant 0 : index
    %15 = vector.load %arg15[%c0_13, %c0_14] : memref<16x32xf32, #tpu.memory_space<vmem>>, vector<16x32xf32>
    %cst_15 = arith.constant dense<0.000000e+00> : vector<16x32xf32>
    %16 = tpu.matmul %14, %15, %cst_15 {dimension_numbers = #tpu.dot_dimension_numbers<[1], [0], [0], [1], [0, 0, 1, 1], [], []>} : vector<16x16xf32>, vector<16x32xf32>, vector<16x32xf32> -> vector<16x32xf32>
    %17 = arith.addf %12, %16 : vector<16x32xf32>
    %18 = vector.broadcast %5 : vector<16x1xf32> to vector<16x32xf32>
    %19 = arith.addf %17, %18 : vector<16x32xf32>
    %c0_16 = arith.constant 0 : index
    %c0_17 = arith.constant 0 : index
    %c0_18 = arith.constant 0 : index
    %20 = vector.load %arg9[%c0_16, %c0_17, %c0_18] : memref<1x16x16xf32, #tpu.memory_space<vmem>>, vector<1x16x16xf32>
    %21 = vector.shape_cast %20 : vector<1x16x16xf32> to vector<16x16xf32>
    %cst_19 = arith.constant dense<0.000000e+00> : vector<16x32xf32>
    %22 = tpu.matmul %21, %19, %cst_19 {dimension_numbers = #tpu.dot_dimension_numbers<[1], [0], [0], [1], [0, 0, 1, 1], [], []>} : vector<16x16xf32>, vector<16x32xf32>, vector<16x32xf32> -> vector<16x32xf32>
    %23 = vector.broadcast %6 : vector<16x1xf32> to vector<16x32xf32>
    %24 = arith.addf %22, %23 : vector<16x32xf32>
    %cst_20 = arith.constant 0.000000e+00 : f32
    %25 = vector.broadcast %cst_20 : f32 to vector<16x32xf32>
    %26 = arith.maximumf %24, %25 : vector<16x32xf32>
    %c0_21 = arith.constant 0 : index
    %c0_22 = arith.constant 0 : index
    %c0_23 = arith.constant 0 : index
    %27 = vector.load %arg10[%c0_21, %c0_22, %c0_23] : memref<1x32x16xf32, #tpu.memory_space<vmem>>, vector<1x32x16xf32>
    %28 = vector.shape_cast %27 : vector<1x32x16xf32> to vector<32x16xf32>
    %cst_24 = arith.constant dense<0.000000e+00> : vector<32x32xf32>
    %29 = tpu.matmul %28, %26, %cst_24 {dimension_numbers = #tpu.dot_dimension_numbers<[1], [0], [0], [1], [0, 0, 1, 1], [], []>} : vector<32x16xf32>, vector<16x32xf32>, vector<32x32xf32> -> vector<32x32xf32>
    %30 = vector.broadcast %7 : vector<32x1xf32> to vector<32x32xf32>
    %31 = arith.addf %29, %30 : vector<32x32xf32>
    %cst_25 = arith.constant 1.000000e+01 : f32
    %32 = vector.broadcast %cst_25 : f32 to vector<32x32xf32>
    %33 = arith.minimumf %31, %32 : vector<32x32xf32>
    %34 = vector.extract_strided_slice %33 {offsets = [0, 0], sizes = [16, 32], strides = [1, 1]} : vector<32x32xf32> to vector<16x32xf32>
    %35 = vector.extract_strided_slice %33 {offsets = [16, 0], sizes = [16, 32], strides = [1, 1]} : vector<32x32xf32> to vector<16x32xf32>
    %36 = math.exp %35 : vector<16x32xf32>
    %cst_26 = arith.constant 1.000000e-03 : f32
    %37 = vector.broadcast %cst_26 : f32 to vector<16x32xf32>
    %38 = arith.addf %36, %37 : vector<16x32xf32>
    %39 = arith.mulf %38, %38 : vector<16x32xf32>
    %cst_27 = arith.constant 1.000000e+00 : f32
    %40 = vector.broadcast %cst_27 : f32 to vector<16x32xf32>
    %41 = arith.divf %40, %39 : vector<16x32xf32>
    %c0_28 = arith.constant 0 : index
    %c0_29 = arith.constant 0 : index
    %c0_30 = arith.constant 0 : index
    %c0_31 = arith.constant 0 : index
    %42 = vector.load %arg5[%c0_28, %c0_29, %c0_30, %c0_31] : memref<1x1x16x32xf32, #tpu.memory_space<vmem>>, vector<1x1x16x32xf32>
    %43 = vector.shape_cast %42 : vector<1x1x16x32xf32> to vector<16x32xf32>
    %44 = arith.mulf %43, %43 : vector<16x32xf32>
    %cst_32 = arith.constant 1.000000e+00 : f32
    %45 = vector.broadcast %cst_32 : f32 to vector<16x32xf32>
    %46 = arith.divf %45, %44 : vector<16x32xf32>
    %47 = arith.addf %41, %46 : vector<16x32xf32>
    %cst_33 = arith.constant 1.000000e-03 : f32
    %48 = vector.broadcast %cst_33 : f32 to vector<16x32xf32>
    %49 = arith.addf %47, %48 : vector<16x32xf32>
    %cst_34 = arith.constant 1.000000e+00 : f32
    %50 = vector.broadcast %cst_34 : f32 to vector<16x32xf32>
    %51 = arith.divf %50, %49 : vector<16x32xf32>
    %52 = arith.mulf %34, %41 : vector<16x32xf32>
    %c0_35 = arith.constant 0 : index
    %c0_36 = arith.constant 0 : index
    %c0_37 = arith.constant 0 : index
    %c0_38 = arith.constant 0 : index
    %53 = vector.load %arg4[%c0_35, %c0_36, %c0_37, %c0_38] : memref<1x1x16x32xf32, #tpu.memory_space<vmem>>, vector<1x1x16x32xf32>
    %54 = vector.shape_cast %53 : vector<1x1x16x32xf32> to vector<16x32xf32>
    %55 = arith.mulf %54, %46 : vector<16x32xf32>
    %56 = arith.addf %52, %55 : vector<16x32xf32>
    %57 = arith.mulf %51, %56 : vector<16x32xf32>
    %c0_39 = arith.constant 0 : index
    %c0_40 = arith.constant 0 : index
    %c0_41 = arith.constant 0 : index
    %c0_42 = arith.constant 0 : index
    %58 = vector.load %arg6[%c0_39, %c0_40, %c0_41, %c0_42] : memref<1x1x16x32xf32, #tpu.memory_space<vmem>>, vector<1x1x16x32xf32>
    %59 = vector.shape_cast %58 : vector<1x1x16x32xf32> to vector<16x32xf32>
    %60 = arith.mulf %59, %51 : vector<16x32xf32>
    %61 = arith.addf %57, %60 : vector<16x32xf32>
    %c0_43 = arith.constant 0 : index
    %c0_44 = arith.constant 0 : index
    %62 = vector.load %arg15[%c0_43, %c0_44] : memref<16x32xf32, #tpu.memory_space<vmem>>, vector<16x32xf32>
    tpu.vector_store %arg15[%c0_43, %c0_44], %61 {strides = array<i32>} : memref<16x32xf32, #tpu.memory_space<vmem>>, vector<16x32xf32>,
    %c0_45 = arith.constant 0 : index
    %c0_46 = arith.constant 0 : index
    %c0_47 = arith.constant 0 : index
    %c0_48 = arith.constant 0 : index
    %63 = vector.load %arg12[%c0_45, %c0_46, %c0_47, %c0_48] : memref<1x1x16x32xf32, #tpu.memory_space<vmem>>, vector<1x1x16x32xf32>
    %64 = vector.shape_cast %63 : vector<1x1x16x32xf32> to vector<16x32xf32>
    %65 = vector.shape_cast %61 : vector<16x32xf32> to vector<1x1x16x32xf32>
    tpu.vector_store %arg12[%c0_45, %c0_46, %c0_47, %c0_48], %65 {strides = array<i32>} : memref<1x1x16x32xf32, #tpu.memory_space<vmem>>, vector<1x1x16x32xf32>,
    %c0_49 = arith.constant 0 : index
    %c0_50 = arith.constant 0 : index
    %c0_51 = arith.constant 0 : index
    %c0_52 = arith.constant 0 : index
    %66 = vector.load %arg13[%c0_49, %c0_50, %c0_51, %c0_52] : memref<1x1x16x32xf32, #tpu.memory_space<vmem>>, vector<1x1x16x32xf32>
    %67 = vector.shape_cast %66 : vector<1x1x16x32xf32> to vector<16x32xf32>
    %68 = vector.shape_cast %57 : vector<16x32xf32> to vector<1x1x16x32xf32>
    tpu.vector_store %arg13[%c0_49, %c0_50, %c0_51, %c0_52], %68 {strides = array<i32>} : memref<1x1x16x32xf32, #tpu.memory_space<vmem>>, vector<1x1x16x32xf32>,
    %c0_53 = arith.constant 0 : index
    %c0_54 = arith.constant 0 : index
    %c0_55 = arith.constant 0 : index
    %c0_56 = arith.constant 0 : index
    %69 = vector.load %arg14[%c0_53, %c0_54, %c0_55, %c0_56] : memref<1x1x16x32xf32, #tpu.memory_space<vmem>>, vector<1x1x16x32xf32>
    %70 = vector.shape_cast %69 : vector<1x1x16x32xf32> to vector<16x32xf32>
    %71 = vector.shape_cast %51 : vector<16x32xf32> to vector<1x1x16x32xf32>
    tpu.vector_store %arg14[%c0_53, %c0_54, %c0_55, %c0_56], %71 {strides = array<i32>} : memref<1x1x16x32xf32, #tpu.memory_space<vmem>>, vector<1x1x16x32xf32>,
    return
  }
  func.func @transform_0(%arg0: i32, %arg1: i32, %arg2: i32) -> (i32, i32, i32, i32) {
    %c3_i32 = arith.constant 3 : i32
    %0 = arith.subi %c3_i32, %arg2 : i32
    %c0_i32 = arith.constant 0 : i32
    %c0_i32_0 = arith.constant 0 : i32
    return %0, %arg0, %c0_i32, %arg1 : i32, i32, i32, i32
  }
  func.func @transform_1(%arg0: i32, %arg1: i32, %arg2: i32) -> (i32, i32, i32, i32) {
    %c3_i32 = arith.constant 3 : i32
    %0 = arith.subi %c3_i32, %arg2 : i32
    %c0_i32 = arith.constant 0 : i32
    %c0_i32_0 = arith.constant 0 : i32
    return %0, %arg0, %c0_i32, %arg1 : i32, i32, i32, i32
  }
  func.func @transform_2(%arg0: i32, %arg1: i32, %arg2: i32) -> (i32, i32, i32, i32) {
    %c3_i32 = arith.constant 3 : i32
    %0 = arith.subi %c3_i32, %arg2 : i32
    %c0_i32 = arith.constant 0 : i32
    %c0_i32_0 = arith.constant 0 : i32
    return %0, %arg0, %c0_i32, %arg1 : i32, i32, i32, i32
  }
  func.func @transform_3(%arg0: i32, %arg1: i32, %arg2: i32) -> (i32, i32, i32, i32) {
    %c0_i32 = arith.constant 0 : i32
    %c0_i32_0 = arith.constant 0 : i32
    return %arg2, %arg0, %c0_i32, %arg1 : i32, i32, i32, i32
  }
  func.func @transform_4(%arg0: i32, %arg1: i32, %arg2: i32) -> (i32, i32, i32) {
    %c0_i32 = arith.constant 0 : i32
    %c0_i32_0 = arith.constant 0 : i32
    %c0_i32_1 = arith.constant 0 : i32
    return %arg2, %c0_i32, %c0_i32_0 : i32, i32, i32
  }
  func.func @transform_5(%arg0: i32, %arg1: i32, %arg2: i32) -> (i32, i32, i32) {
    %c0_i32 = arith.constant 0 : i32
    %c0_i32_0 = arith.constant 0 : i32
    %c0_i32_1 = arith.constant 0 : i32
    return %arg2, %c0_i32, %c0_i32_0 : i32, i32, i32
  }
  func.func @transform_6(%arg0: i32, %arg1: i32, %arg2: i32) -> (i32, i32, i32) {
    %c0_i32 = arith.constant 0 : i32
    %c0_i32_0 = arith.constant 0 : i32
    %c0_i32_1 = arith.constant 0 : i32
    return %arg2, %c0_i32, %c0_i32_0 : i32, i32, i32
  }
  func.func @transform_7(%arg0: i32, %arg1: i32, %arg2: i32) -> (i32, i32, i32) {
    %c0_i32 = arith.constant 0 : i32
    %c0_i32_0 = arith.constant 0 : i32
    %c0_i32_1 = arith.constant 0 : i32
    return %arg2, %c0_i32, %c0_i32_0 : i32, i32, i32
  }
  func.func @transform_8(%arg0: i32, %arg1: i32, %arg2: i32) -> (i32, i32, i32) {
    %c0_i32 = arith.constant 0 : i32
    %c0_i32_0 = arith.constant 0 : i32
    %c0_i32_1 = arith.constant 0 : i32
    return %arg2, %c0_i32, %c0_i32_0 : i32, i32, i32
  }
  func.func @transform_9(%arg0: i32, %arg1: i32, %arg2: i32) -> (i32, i32, i32, i32) {
    %c0_i32 = arith.constant 0 : i32
    %c0_i32_0 = arith.constant 0 : i32
    return %arg2, %arg0, %c0_i32, %arg1 : i32, i32, i32, i32
  }
  func.func @transform_10(%arg0: i32, %arg1: i32, %arg2: i32) -> (i32, i32, i32, i32) {
    %c0_i32 = arith.constant 0 : i32
    %c0_i32_0 = arith.constant 0 : i32
    return %arg2, %arg0, %c0_i32, %arg1 : i32, i32, i32, i32
  }
  func.func @transform_11(%arg0: i32, %arg1: i32, %arg2: i32) -> (i32, i32, i32, i32) {
    %c0_i32 = arith.constant 0 : i32
    %c0_i32_0 = arith.constant 0 : i32
    return %arg2, %arg0, %c0_i32, %arg1 : i32, i32, i32, i32
  }
}

</mosaic_0001>

<llo_original>
// kernel: tpu_custom_call.1
$region0: #{tpu_custom_call.1}
  #allocation0 [shape = 'u32[]', space=smem, size = 0x4, offset = 0x4, fixed_abs, tag = 'smem constant byte address 0x4 - core index']
  #allocation1 [shape = 'u32[72,128]{1,0:T(1,128)}', space=vmem, size = 0x9000, scoped, tag = 'internal scratch']
  #allocation2 [shape = 'f32[16,32]{1,0:T(8,128)}', space=vmem, size = 0x2000, scoped, tag = 'scratch operand']
  %s0 = inlined_call_operand.vmem [shape: f32[4,2,32,32], index: 0, kind: input, shape index: {}]
  %s1 = inlined_call_operand.vmem [shape: f32[4,2,16,32], index: 1, kind: input, shape index: {}]
  %s2 = inlined_call_operand.hbm [shape: f32[4,2,16,32], index: 2, kind: input, shape index: {}]
  %s3 = inlined_call_operand.hbm [shape: f32[4,2,16,32], index: 3, kind: input, shape index: {}]
  %s4 = inlined_call_operand.vmem [shape: f32[4,16,32], index: 4, kind: input, shape index: {}]
  %s5 = inlined_call_operand.hbm [shape: f32[4,16,16], index: 5, kind: input, shape index: {}]
  %s6 = inlined_call_operand.hbm [shape: f32[4,16,16], index: 6, kind: input, shape index: {}]
  %s7 = inlined_call_operand.vmem [shape: f32[4,32,16], index: 7, kind: input, shape index: {}]
  %s8 = inlined_call_operand.vmem [shape: f32[4,64,1], index: 8, kind: input, shape index: {}]
  %s9 = inlined_call_operand.hbm [shape: f32[4,2,16,32], index: 9, kind: output, shape index: {0}]
  %s10 = inlined_call_operand.hbm [shape: f32[4,2,16,32], index: 10, kind: output, shape index: {1}]
  %s11 = inlined_call_operand.hbm [shape: f32[4,2,16,32], index: 11, kind: output, shape index: {2}]
  %12 = xla_tuple %s9, %s10, %s11
  %s13 = sld [smem:[#allocation0]]
  $region105: #{tpu_custom_call.1} parent=0
    _
  %s15 = ssub.s32 1, %s13
  %s16 = scalar_select 0, %s15, %s13
  $region1: #{tpu_custom_call.1} parent=0
    #allocation3 [shape = 'u8[16384]{0}', space=vmem, size = 0x4000, scoped, tag = 'input window, operand 2']
    #allocation4 [shape = 's32[2]{0}', space=sflag, size = 0x8, scoped, tag = 'scoped memory for tpu_custom_call.1']
    #allocation5 [shape = 's32[2]{0}', space=sflag, size = 0x8, scoped, tag = 'scoped memory for tpu_custom_call.1']
    #allocation6 [shape = 'u8[16384]{0}', space=vmem, size = 0x4000, scoped, tag = 'input window, operand 3']
    #allocation7 [shape = 's32[2]{0}', space=sflag, size = 0x8, scoped, tag = 'scoped memory for tpu_custom_call.1']
    #allocation8 [shape = 'u8[16384]{0}', space=vmem, size = 0x4000, scoped, tag = 'input window, operand 5']
    #allocation9 [shape = 'u8[16384]{0}', space=vmem, size = 0x4000, scoped, tag = 'input window, operand 6']
    #allocation10 [shape = 's32[2]{0}', space=sflag, size = 0x8, scoped, tag = 'scoped memory for tpu_custom_call.1']
    #allocation11 [shape = 'u8[16384]{0}', space=vmem, size = 0x4000, scoped, tag = 'output window, operand 0']
    #allocation12 [shape = 'u8[16384]{0}', space=vmem, size = 0x4000, scoped, tag = 'output window, operand 1']
    #allocation13 [shape = 's32[2]{0}', space=sflag, size = 0x8, scoped, tag = 'scoped memory for tpu_custom_call.1']
    #allocation14 [shape = 'u8[16384]{0}', space=vmem, size = 0x4000, scoped, tag = 'output window, operand 2']
    %17 = vsyncpa [#allocation4], 0
    %s18 = scalar_lea.sflag [#allocation4], 1
    %19 = vsyncpa %s18, 0
    %20 = vsyncpa [#allocation7], 0
    %s21 = scalar_lea.sflag [#allocation7], 1
    %22 = vsyncpa %s21, 0
    %23 = vsyncpa [#allocation10], 0
    %s24 = scalar_lea.sflag [#allocation10], 1
    %25 = vsyncpa %s24, 0
    %26 = vsyncpa [#allocation5], 0
    %s27 = scalar_lea.sflag [#allocation5], 1
    %28 = vsyncpa %s27, 0
    %29 = vsyncpa [#allocation13], 0
    %s30 = scalar_lea.sflag [#allocation13], 1
    %31 = vsyncpa %s30, 0
    loop: start=0, step=1, limit=10
    $region2: #{tpu_custom_call.1} parent=1 // loop_pre_header
      _
    $region3: #{tpu_custom_call.1} parent=1 // loop_header
      %s33 = sphi 0, %s37
      %p34 = scmp.ge.s32.totalorder %s33, 10
      %s40 = sphi 0, %s59
      %s41 = sphi 0, %s55
      %s42 = sphi 0, %s51
      %s43 = sphi 0, %s40
      %s44 = sphi 0, %s41
      %s45 = sphi 0, %s42
      %s46 = sphi 0, %s43
      %s47 = sphi 0, %s44
      %s48 = sphi 0, %s45
      %s68 = sphi 0, %s70
      %s71 = sphi 0, %s68
      %s72 = sphi 0, %s71
      %s88 = sphi 0, %s72
      %s100 = sphi 0, %s102
      %s103 = sphi 0, %s100
      %s104 = sphi 0, %s103
      %s120 = sphi 0, %s104
      %s132 = sphi 0, %s134
      %s135 = sphi 0, %s132
      %s136 = sphi 0, %s135
      %s152 = sphi 0, %s136
      %s162 = sphi 0, %s164
      %s165 = sphi 0, %s162
      %s166 = sphi 0, %s165
      %s182 = sphi 0, %s166
      %s188 = sphi 0, %s190
      %s191 = sphi 0, %s188
      %s192 = sphi 0, %s191
      %s208 = sphi 0, %s192
      %s214 = sphi 0, %s216
      %s217 = sphi 0, %s214
      %s218 = sphi 0, %s217
      %s234 = sphi 0, %s218
      %s240 = sphi 0, %s242
      %s243 = sphi 0, %s240
      %s244 = sphi 0, %s243
      %s260 = sphi 0, %s244
      %s266 = sphi 0, %s268
      %s269 = sphi 0, %s266
      %s270 = sphi 0, %s269
      %s286 = sphi 0, %s270
      %s292 = sphi 0, %s294
      %s295 = sphi 0, %s292
      %s296 = sphi 0, %s295
      %s312 = sphi 0, %s296
      %s322 = sphi 0, %s324
      %s325 = sphi 0, %s322
      %s326 = sphi 0, %s325
      %s342 = sphi 0, %s326
      %s352 = sphi 0, %s354
      %s355 = sphi 0, %s352
      %s356 = sphi 0, %s355
      %s372 = sphi 0, %s356
      %s382 = sphi 0, %s384
      %s385 = sphi 0, %s382
      %s386 = sphi 0, %s385
      %s402 = sphi 0, %s386
    $region4: #{tpu_custom_call.1} parent=1 // loop_header_branch
      %36 = sbr.rel (%p34) target = $region8
    $region5: #{tpu_custom_call.1} parent=1 // loop_body
      %s38 = ssub.s32 %s33, 1
      %s39 = ssub.s32 %s33, 2
      %s49 = sadd.s32 1, %s42
      %p50 = scmp.ge.s32.totalorder %s49, 4
      %s51 = scalar_select %p50, 0, %s49
      %s52 = sadd.s32 1, %s41
      %s53 = scalar_select %p50, %s52, %s41
      %p54 = scmp.ge.s32.totalorder %s53, 1
      %s55 = scalar_select %p54, 0, %s53
      %s56 = sadd.s32 1, %s40
      %s57 = scalar_select %p54, %s56, %s40
      %p58 = scmp.ge.s32.totalorder %s57, 2
      %s59 = scalar_select %p58, 0, %s57
      %s60 = ssub.s32 3, %s42
      %s61 = ssub.s32 3, %s51
      %s62 = ssub.s32 %s60, %s61
      %s63 = ssub.s32 %s40, %s59
      %s64 = sor.u32 %s62, %s63
      %s65 = ssub.s32 %s41, %s55
      %s66 = sor.u32 %s64, %s65
      %p67 = scmp.eq.s32.totalorder %s66, 0
      %s69 = sadd.s32 %s68, 1
      %s70 = scalar_select %p67, %s68, %s69
      %p73 = pneg %p67
      %p74 = scmp.eq.s32.totalorder %s33, 7
      %p75 = por %p73, %p74
      %p76 = scmp.ne.s32.totalorder %s68, %s71
      %p77 = scmp.eq.s32.totalorder %s33, 0
      %p78 = por %p76, %p77
      %p79 = scmp.ne.s32.totalorder %s68, %s71
      %p80 = scmp.eq.s32.totalorder %s38, 7
      %p81 = por %p79, %p80
      %p82 = scmp.ne.s32.totalorder %s71, %s72
      %p83 = scmp.eq.s32.totalorder %s38, 0
      %p84 = por %p82, %p83
      %p85 = scmp.ne.s32.totalorder %s71, %s72
      %p86 = scmp.eq.s32.totalorder %s39, 7
      %p87 = por %p85, %p86
      %p89 = scmp.ne.s32.totalorder %s72, %s88
      %p90 = scmp.eq.s32.totalorder %s39, 0
      %p91 = por %p89, %p90
      %s92 = ssub.s32 3, %s42
      %s93 = ssub.s32 3, %s51
      %s94 = ssub.s32 %s92, %s93
      %s95 = ssub.s32 %s40, %s59
      %s96 = sor.u32 %s94, %s95
      %s97 = ssub.s32 %s41, %s55
      %s98 = sor.u32 %s96, %s97
      %p99 = scmp.eq.s32.totalorder %s98, 0
      %s101 = sadd.s32 %s100, 1
      %s102 = scalar_select %p99, %s100, %s101
      %p105 = pneg %p99
      %p106 = scmp.eq.s32.totalorder %s33, 7
      %p107 = por %p105, %p106
      %p108 = scmp.ne.s32.totalorder %s100, %s103
      %p109 = scmp.eq.s32.totalorder %s33, 0
      %p110 = por %p108, %p109
      %p111 = scmp.ne.s32.totalorder %s100, %s103
      %p112 = scmp.eq.s32.totalorder %s38, 7
      %p113 = por %p111, %p112
      %p114 = scmp.ne.s32.totalorder %s103, %s104
      %p115 = scmp.eq.s32.totalorder %s38, 0
      %p116 = por %p114, %p115
      %p117 = scmp.ne.s32.totalorder %s103, %s104
      %p118 = scmp.eq.s32.totalorder %s39, 7
      %p119 = por %p117, %p118
      %p121 = scmp.ne.s32.totalorder %s104, %s120
      %p122 = scmp.eq.s32.totalorder %s39, 0
      %p123 = por %p121, %p122
      %s124 = ssub.s32 3, %s42
      %s125 = ssub.s32 3, %s51
      %s126 = ssub.s32 %s124, %s125
      %s127 = ssub.s32 %s40, %s59
      %s128 = sor.u32 %s126, %s127
      %s129 = ssub.s32 %s41, %s55
      %s130 = sor.u32 %s128, %s129
      %p131 = scmp.eq.s32.totalorder %s130, 0
      %s133 = sadd.s32 %s132, 1
      %s134 = scalar_select %p131, %s132, %s133
      %p137 = pneg %p131
      %p138 = scmp.eq.s32.totalorder %s33, 7
      %p139 = por %p137, %p138
      %p140 = scmp.ne.s32.totalorder %s132, %s135
      %p141 = scmp.eq.s32.totalorder %s33, 0
      %p142 = por %p140, %p141
      %p143 = scmp.ne.s32.totalorder %s132, %s135
      %p144 = scmp.eq.s32.totalorder %s38, 7
      %p145 = por %p143, %p144
      %p146 = scmp.ne.s32.totalorder %s135, %s136
      %p147 = scmp.eq.s32.totalorder %s38, 0
      %p148 = por %p146, %p147
      %p149 = scmp.ne.s32.totalorder %s135, %s136
      %p150 = scmp.eq.s32.totalorder %s39, 7
      %p151 = por %p149, %p150
      %p153 = scmp.ne.s32.totalorder %s136, %s152
      %p154 = scmp.eq.s32.totalorder %s39, 0
      %p155 = por %p153, %p154
      %s156 = ssub.s32 %s42, %s51
      %s157 = ssub.s32 %s40, %s59
      %s158 = sor.u32 %s156, %s157
      %s159 = ssub.s32 %s41, %s55
      %s160 = sor.u32 %s158, %s159
      %p161 = scmp.eq.s32.totalorder %s160, 0
      %s163 = sadd.s32 %s162, 1
      %s164 = scalar_select %p161, %s162, %s163
      %p167 = pneg %p161
      %p168 = scmp.eq.s32.totalorder %s33, 7
      %p169 = por %p167, %p168
      %p170 = scmp.ne.s32.totalorder %s162, %s165
      %p171 = scmp.eq.s32.totalorder %s33, 0
      %p172 = por %p170, %p171
      %p173 = scmp.ne.s32.totalorder %s162, %s165
      %p174 = scmp.eq.s32.totalorder %s38, 7
      %p175 = por %p173, %p174
      %p176 = scmp.ne.s32.totalorder %s165, %s166
      %p177 = scmp.eq.s32.totalorder %s38, 0
      %p178 = por %p176, %p177
      %p179 = scmp.ne.s32.totalorder %s165, %s166
      %p180 = scmp.eq.s32.totalorder %s39, 7
      %p181 = por %p179, %p180
      %p183 = scmp.ne.s32.totalorder %s166, %s182
      %p184 = scmp.eq.s32.totalorder %s39, 0
      %p185 = por %p183, %p184
      %s186 = ssub.s32 %s42, %s51
      %p187 = scmp.eq.s32.totalorder %s186, 0
      %s189 = sadd.s32 %s188, 1
      %s190 = scalar_select %p187, %s188, %s189
      %p193 = pneg %p187
      %p194 = scmp.eq.s32.totalorder %s33, 7
      %p195 = por %p193, %p194
      %p196 = scmp.ne.s32.totalorder %s188, %s191
      %p197 = scmp.eq.s32.totalorder %s33, 0
      %p198 = por %p196, %p197
      %p199 = scmp.ne.s32.totalorder %s188, %s191
      %p200 = scmp.eq.s32.totalorder %s38, 7
      %p201 = por %p199, %p200
      %p202 = scmp.ne.s32.totalorder %s191, %s192
      %p203 = scmp.eq.s32.totalorder %s38, 0
      %p204 = por %p202, %p203
      %p205 = scmp.ne.s32.totalorder %s191, %s192
      %p206 = scmp.eq.s32.totalorder %s39, 7
      %p207 = por %p205, %p206
      %p209 = scmp.ne.s32.totalorder %s192, %s208
      %p210 = scmp.eq.s32.totalorder %s39, 0
      %p211 = por %p209, %p210
      %s212 = ssub.s32 %s42, %s51
      %p213 = scmp.eq.s32.totalorder %s212, 0
      %s215 = sadd.s32 %s214, 1
      %s216 = scalar_select %p213, %s214, %s215
      %p219 = pneg %p213
      %p220 = scmp.eq.s32.totalorder %s33, 7
      %p221 = por %p219, %p220
      %p222 = scmp.ne.s32.totalorder %s214, %s217
      %p223 = scmp.eq.s32.totalorder %s33, 0
      %p224 = por %p222, %p223
      %p225 = scmp.ne.s32.totalorder %s214, %s217
      %p226 = scmp.eq.s32.totalorder %s38, 7
      %p227 = por %p225, %p226
      %p228 = scmp.ne.s32.totalorder %s217, %s218
      %p229 = scmp.eq.s32.totalorder %s38, 0
      %p230 = por %p228, %p229
      %p231 = scmp.ne.s32.totalorder %s217, %s218
      %p232 = scmp.eq.s32.totalorder %s39, 7
      %p233 = por %p231, %p232
      %p235 = scmp.ne.s32.totalorder %s218, %s234
      %p236 = scmp.eq.s32.totalorder %s39, 0
      %p237 = por %p235, %p236
      %s238 = ssub.s32 %s42, %s51
      %p239 = scmp.eq.s32.totalorder %s238, 0
      %s241 = sadd.s32 %s240, 1
      %s242 = scalar_select %p239, %s240, %s241
      %p245 = pneg %p239
      %p246 = scmp.eq.s32.totalorder %s33, 7
      %p247 = por %p245, %p246
      %p248 = scmp.ne.s32.totalorder %s240, %s243
      %p249 = scmp.eq.s32.totalorder %s33, 0
      %p250 = por %p248, %p249
      %p251 = scmp.ne.s32.totalorder %s240, %s243
      %p252 = scmp.eq.s32.totalorder %s38, 7
      %p253 = por %p251, %p252
      %p254 = scmp.ne.s32.totalorder %s243, %s244
      %p255 = scmp.eq.s32.totalorder %s38, 0
      %p256 = por %p254, %p255
      %p257 = scmp.ne.s32.totalorder %s243, %s244
      %p258 = scmp.eq.s32.totalorder %s39, 7
      %p259 = por %p257, %p258
      %p261 = scmp.ne.s32.totalorder %s244, %s260
      %p262 = scmp.eq.s32.totalorder %s39, 0
      %p263 = por %p261, %p262
      %s264 = ssub.s32 %s42, %s51
      %p265 = scmp.eq.s32.totalorder %s264, 0
      %s267 = sadd.s32 %s266, 1
      %s268 = scalar_select %p265, %s266, %s267
      %p271 = pneg %p265
      %p272 = scmp.eq.s32.totalorder %s33, 7
      %p273 = por %p271, %p272
      %p274 = scmp.ne.s32.totalorder %s266, %s269
      %p275 = scmp.eq.s32.totalorder %s33, 0
      %p276 = por %p274, %p275
      %p277 = scmp.ne.s32.totalorder %s266, %s269
      %p278 = scmp.eq.s32.totalorder %s38, 7
      %p279 = por %p277, %p278
      %p280 = scmp.ne.s32.totalorder %s269, %s270
      %p281 = scmp.eq.s32.totalorder %s38, 0
      %p282 = por %p280, %p281
      %p283 = scmp.ne.s32.totalorder %s269, %s270
      %p284 = scmp.eq.s32.totalorder %s39, 7
      %p285 = por %p283, %p284
      %p287 = scmp.ne.s32.totalorder %s270, %s286
      %p288 = scmp.eq.s32.totalorder %s39, 0
      %p289 = por %p287, %p288
      %s290 = ssub.s32 %s42, %s51
      %p291 = scmp.eq.s32.totalorder %s290, 0
      %s293 = sadd.s32 %s292, 1
      %s294 = scalar_select %p291, %s292, %s293
      %p297 = pneg %p291
      %p298 = scmp.eq.s32.totalorder %s33, 7
      %p299 = por %p297, %p298
      %p300 = scmp.ne.s32.totalorder %s292, %s295
      %p301 = scmp.eq.s32.totalorder %s33, 0
      %p302 = por %p300, %p301
      %p303 = scmp.ne.s32.totalorder %s292, %s295
      %p304 = scmp.eq.s32.totalorder %s38, 7
      %p305 = por %p303, %p304
      %p306 = scmp.ne.s32.totalorder %s295, %s296
      %p307 = scmp.eq.s32.totalorder %s38, 0
      %p308 = por %p306, %p307
      %p309 = scmp.ne.s32.totalorder %s295, %s296
      %p310 = scmp.eq.s32.totalorder %s39, 7
      %p311 = por %p309, %p310
      %p313 = scmp.ne.s32.totalorder %s296, %s312
      %p314 = scmp.eq.s32.totalorder %s39, 0
      %p315 = por %p313, %p314
      %s316 = ssub.s32 %s42, %s51
      %s317 = ssub.s32 %s40, %s59
      %s318 = sor.u32 %s316, %s317
      %s319 = ssub.s32 %s41, %s55
      %s320 = sor.u32 %s318, %s319
      %p321 = scmp.eq.s32.totalorder %s320, 0
      %s323 = sadd.s32 %s322, 1
      %s324 = scalar_select %p321, %s322, %s323
      %p327 = pneg %p321
      %p328 = scmp.eq.s32.totalorder %s33, 7
      %p329 = por %p327, %p328
      %p330 = scmp.ne.s32.totalorder %s322, %s325
      %p331 = scmp.eq.s32.totalorder %s33, 0
      %p332 = por %p330, %p331
      %p333 = scmp.ne.s32.totalorder %s322, %s325
      %p334 = scmp.eq.s32.totalorder %s38, 7
      %p335 = por %p333, %p334
      %p336 = scmp.ne.s32.totalorder %s325, %s326
      %p337 = scmp.eq.s32.totalorder %s38, 0
      %p338 = por %p336, %p337
      %p339 = scmp.ne.s32.totalorder %s325, %s326
      %p340 = scmp.eq.s32.totalorder %s39, 7
      %p341 = por %p339, %p340
      %p343 = scmp.ne.s32.totalorder %s326, %s342
      %p344 = scmp.eq.s32.totalorder %s39, 0
      %p345 = por %p343, %p344
      %s346 = ssub.s32 %s42, %s51
      %s347 = ssub.s32 %s40, %s59
      %s348 = sor.u32 %s346, %s347
      %s349 = ssub.s32 %s41, %s55
      %s350 = sor.u32 %s348, %s349
      %p351 = scmp.eq.s32.totalorder %s350, 0
      %s353 = sadd.s32 %s352, 1
      %s354 = scalar_select %p351, %s352, %s353
      %p357 = pneg %p351
      %p358 = scmp.eq.s32.totalorder %s33, 7
      %p359 = por %p357, %p358
      %p360 = scmp.ne.s32.totalorder %s352, %s355
      %p361 = scmp.eq.s32.totalorder %s33, 0
      %p362 = por %p360, %p361
      %p363 = scmp.ne.s32.totalorder %s352, %s355
      %p364 = scmp.eq.s32.totalorder %s38, 7
      %p365 = por %p363, %p364
      %p366 = scmp.ne.s32.totalorder %s355, %s356
      %p367 = scmp.eq.s32.totalorder %s38, 0
      %p368 = por %p366, %p367
      %p369 = scmp.ne.s32.totalorder %s355, %s356
      %p370 = scmp.eq.s32.totalorder %s39, 7
      %p371 = por %p369, %p370
      %p373 = scmp.ne.s32.totalorder %s356, %s372
      %p374 = scmp.eq.s32.totalorder %s39, 0
      %p375 = por %p373, %p374
      %s376 = ssub.s32 %s42, %s51
      %s377 = ssub.s32 %s40, %s59
      %s378 = sor.u32 %s376, %s377
      %s379 = ssub.s32 %s41, %s55
      %s380 = sor.u32 %s378, %s379
      %p381 = scmp.eq.s32.totalorder %s380, 0
      %s383 = sadd.s32 %s382, 1
      %s384 = scalar_select %p381, %s382, %s383
      %p387 = pneg %p381
      %p388 = scmp.eq.s32.totalorder %s33, 7
      %p389 = por %p387, %p388
      %p390 = scmp.ne.s32.totalorder %s382, %s385
      %p391 = scmp.eq.s32.totalorder %s33, 0
      %p392 = por %p390, %p391
      %p393 = scmp.ne.s32.totalorder %s382, %s385
      %p394 = scmp.eq.s32.totalorder %s38, 7
      %p395 = por %p393, %p394
      %p396 = scmp.ne.s32.totalorder %s385, %s386
      %p397 = scmp.eq.s32.totalorder %s38, 0
      %p398 = por %p396, %p397
      %p399 = scmp.ne.s32.totalorder %s385, %s386
      %p400 = scmp.eq.s32.totalorder %s39, 7
      %p401 = por %p399, %p400
      %p403 = scmp.ne.s32.totalorder %s386, %s402
      %p404 = scmp.eq.s32.totalorder %s39, 0
      %p405 = por %p403, %p404
      %p406 = scmp.le.s32.totalorder 1, %s33
      %p407 = scmp.lt.s32.totalorder %s33, 9
      %p408 = pnand %p406, %p407
      %p409 = pneg %p408
      // Predicated region
      $region9: #{tpu_custom_call.1} parent=5 // pred_check
        _
      $region10: #{tpu_custom_call.1} parent=5 // pred_check_branch
        %411 = sbr.rel (%p408) target = $region12
      $region11: #{tpu_custom_call.1} parent=5 // pred_region
        %s412 = ssub.s32 %s33, 1
      $region12: #{tpu_custom_call.1} parent=5 // pred_fallthru
        _
      %p413 = scmp.lt.s32.totalorder %s33, 8
      // Predicated region
      $region13: #{tpu_custom_call.1} parent=5 // pred_check
        %p414 = pneg %p413
      $region14: #{tpu_custom_call.1} parent=5 // pred_check_branch
        %416 = sbr.rel (%p414) target = $region16
      $region15: #{tpu_custom_call.1} parent=5 // pred_region
        // Predicated region
        $region17: #{tpu_custom_call.1} parent=15 // pred_check
          %p417 = pneg %p78
        $region18: #{tpu_custom_call.1} parent=15 // pred_check_branch
          %419 = sbr.rel (%p417) target = $region20
        $region19: #{tpu_custom_call.1} parent=15 // pred_region
          %s420 = ssub.s32 3, %s42
          %p421 = scmp.lt.s32.totalorder %s420, 3
          %s422 = scalar_select %p421, %s420, 3
          %p423 = scmp.lt.s32.totalorder %s40, 1
          %s424 = scalar_select %p423, %s40, 1
          %p425 = scmp.lt.s32.totalorder %s41, 0
          %s426 = scalar_select %p425, %s41, 0
          %s427 = smul.addr %s424, 4
          %s428 = sadd.s32 %s426, %s427
          %s429 = smul.addr %s422, 8
          %s430 = sadd.s32 %s428, %s429
          %s431 = smul.addr %s430, 8
          %s432 = scalar_lea.vmem %s0, %s431
          %s433 = ssub.s32 3, %s42
        $region20: #{tpu_custom_call.1} parent=15 // pred_fallthru
          _
        // Predicated region
        $region21: #{tpu_custom_call.1} parent=15 // pred_check
          %p434 = pneg %p110
        $region22: #{tpu_custom_call.1} parent=15 // pred_check_branch
          %436 = sbr.rel (%p434) target = $region24
        $region23: #{tpu_custom_call.1} parent=15 // pred_region
          %s437 = ssub.s32 3, %s42
          %p438 = scmp.lt.s32.totalorder %s437, 3
          %s439 = scalar_select %p438, %s437, 3
          %p440 = scmp.lt.s32.totalorder %s40, 1
          %s441 = scalar_select %p440, %s40, 1
          %p442 = scmp.lt.s32.totalorder %s41, 0
          %s443 = scalar_select %p442, %s41, 0
          %s444 = smul.addr %s441, 2
          %s445 = sadd.s32 %s443, %s444
          %s446 = smul.addr %s439, 4
          %s447 = sadd.s32 %s445, %s446
          %s448 = smul.addr %s447, 8
          %s449 = scalar_lea.vmem %s1, %s448
          %s450 = ssub.s32 3, %s42
        $region24: #{tpu_custom_call.1} parent=15 // pred_fallthru
          _
        // Predicated region
        $region25: #{tpu_custom_call.1} parent=15 // pred_check
          %p451 = pneg %p142
        $region26: #{tpu_custom_call.1} parent=15 // pred_check_branch
          %453 = sbr.rel (%p451) target = $region28
        $region27: #{tpu_custom_call.1} parent=15 // pred_region
          %s454 = sand.u32 %s132, 1
          %s455 = scalar_lea.sflag [#allocation4], %s454
          %s456 = sand.u32 %s132, 1
          %s457 = smul.addr %s456, 16
          %s458 = scalar_lea.vmem [#allocation3], %s457
          %s459 = ssub.s32 3, %s42
          %461 = vsyncadd %s455, 0
          %s462 = smul.addr %s40, 2
          %s463 = sadd.s32 %s41, %s462
          %s464 = smul.addr %s459, 4
          %s465 = sadd.s32 %s463, %s464
          %s466 = smul.addr %s465, 8
          %s467 = scalar_lea.hbm %s2, %s466
          %s468 = sshll.u32 %s467, 4
          %s469 = int_to_ptr.hbm [resolvable:$true] %s468
          %s470 = sshll.u32 %s458, 4
          %s471 = int_to_ptr.vmem [resolvable:$true] %s470
          %476 = dma.hbm_to_vmem [thread:$0]  %s469, 256, %s471, %s455, 128, 128, 8
        $region28: #{tpu_custom_call.1} parent=15 // pred_fallthru
          _
        // Predicated region
        $region29: #{tpu_custom_call.1} parent=15 // pred_check
          %p477 = pneg %p172
        $region30: #{tpu_custom_call.1} parent=15 // pred_check_branch
          %479 = sbr.rel (%p477) target = $region32
        $region31: #{tpu_custom_call.1} parent=15 // pred_region
          %s480 = sand.u32 %s33, 1
          %s481 = scalar_lea.sflag [#allocation7], %s480
          %s482 = sand.u32 %s162, 1
          %s483 = smul.addr %s482, 16
          %s484 = scalar_lea.vmem [#allocation6], %s483
          %486 = vsyncadd %s481, 0
          %s487 = smul.addr %s40, 2
          %s488 = sadd.s32 %s41, %s487
          %s489 = smul.addr %s42, 4
          %s490 = sadd.s32 %s488, %s489
          %s491 = smul.addr %s490, 8
          %s492 = scalar_lea.hbm %s3, %s491
          %s493 = sshll.u32 %s492, 4
          %s494 = int_to_ptr.hbm [resolvable:$true] %s493
          %s495 = sshll.u32 %s484, 4
          %s496 = int_to_ptr.vmem [resolvable:$true] %s495
          %501 = dma.hbm_to_vmem [thread:$0]  %s494, 256, %s496, %s481, 128, 128, 8
        $region32: #{tpu_custom_call.1} parent=15 // pred_fallthru
          _
        // Predicated region
        $region33: #{tpu_custom_call.1} parent=15 // pred_check
          %p502 = pneg %p198
        $region34: #{tpu_custom_call.1} parent=15 // pred_check_branch
          %504 = sbr.rel (%p502) target = $region36
        $region35: #{tpu_custom_call.1} parent=15 // pred_region
          %p505 = scmp.lt.s32.totalorder %s42, 3
          %s506 = scalar_select %p505, %s42, 3
          %s507 = smul.addr %s506, 2
          %s508 = smul.addr %s507, 8
          %s509 = scalar_lea.vmem %s4, %s508
        $region36: #{tpu_custom_call.1} parent=15 // pred_fallthru
          _
        // Predicated region
        $region37: #{tpu_custom_call.1} parent=15 // pred_check
          %p510 = pneg %p224
        $region38: #{tpu_custom_call.1} parent=15 // pred_check_branch
          %512 = sbr.rel (%p510) target = $region40
        $region39: #{tpu_custom_call.1} parent=15 // pred_region
          %s513 = sand.u32 %s33, 1
          %s514 = scalar_lea.sflag [#allocation7], %s513
          %s515 = sand.u32 %s214, 1
          %s516 = smul.addr %s515, 16
          %s517 = scalar_lea.vmem [#allocation8], %s516
          %519 = vsyncadd %s514, 0
          %s520 = smul.addr %s42, 2
          %s521 = smul.addr %s520, 8
          %s522 = scalar_lea.hbm %s5, %s521
          %s523 = sshll.u32 %s522, 4
          %s524 = int_to_ptr.hbm [resolvable:$true] %s523
          %s525 = sshll.u32 %s517, 4
          %s526 = int_to_ptr.vmem [resolvable:$true] %s525
          %531 = dma.hbm_to_vmem [thread:$0]  %s524, 256, %s526, %s514, 128, 128, 8
        $region40: #{tpu_custom_call.1} parent=15 // pred_fallthru
          _
        // Predicated region
        $region41: #{tpu_custom_call.1} parent=15 // pred_check
          %p532 = pneg %p250
        $region42: #{tpu_custom_call.1} parent=15 // pred_check_branch
          %534 = sbr.rel (%p532) target = $region44
        $region43: #{tpu_custom_call.1} parent=15 // pred_region
          %s535 = sand.u32 %s240, 1
          %s536 = scalar_lea.sflag [#allocation10], %s535
          %s537 = sand.u32 %s240, 1
          %s538 = smul.addr %s537, 16
          %s539 = scalar_lea.vmem [#allocation9], %s538
          %541 = vsyncadd %s536, 0
          %s542 = smul.addr %s42, 2
          %s543 = smul.addr %s542, 8
          %s544 = scalar_lea.hbm %s6, %s543
          %s545 = sshll.u32 %s544, 4
          %s546 = int_to_ptr.hbm [resolvable:$true] %s545
          %s547 = sshll.u32 %s539, 4
          %s548 = int_to_ptr.vmem [resolvable:$true] %s547
          %553 = dma.hbm_to_vmem [thread:$0]  %s546, 256, %s548, %s536, 128, 128, 8
        $region44: #{tpu_custom_call.1} parent=15 // pred_fallthru
          _
        // Predicated region
        $region45: #{tpu_custom_call.1} parent=15 // pred_check
          %p554 = pneg %p276
        $region46: #{tpu_custom_call.1} parent=15 // pred_check_branch
          %556 = sbr.rel (%p554) target = $region48
        $region47: #{tpu_custom_call.1} parent=15 // pred_region
          %p557 = scmp.lt.s32.totalorder %s42, 3
          %s558 = scalar_select %p557, %s42, 3
          %s559 = smul.addr %s558, 4
          %s560 = smul.addr %s559, 8
          %s561 = scalar_lea.vmem %s7, %s560
        $region48: #{tpu_custom_call.1} parent=15 // pred_fallthru
          _
        // Predicated region
        $region49: #{tpu_custom_call.1} parent=15 // pred_check
          %p562 = pneg %p302
        $region50: #{tpu_custom_call.1} parent=15 // pred_check_branch
          %564 = sbr.rel (%p562) target = $region52
        $region51: #{tpu_custom_call.1} parent=15 // pred_region
          %p565 = scmp.lt.s32.totalorder %s42, 3
          %s566 = scalar_select %p565, %s42, 3
          %s567 = smul.addr %s566, 8
          %s568 = smul.addr %s567, 8
          %s569 = scalar_lea.vmem %s8, %s568
        $region52: #{tpu_custom_call.1} parent=15 // pred_fallthru
          _
      $region16: #{tpu_custom_call.1} parent=5 // pred_fallthru
        _
      %p570 = scmp.le.s32.totalorder 1, %s33
      %p571 = scmp.lt.s32.totalorder %s33, 9
      %p572 = pnand %p570, %p571
      %p573 = pneg %p572
      // Predicated region
      $region53: #{tpu_custom_call.1} parent=5 // pred_check
        _
      $region54: #{tpu_custom_call.1} parent=5 // pred_check_branch
        %575 = sbr.rel (%p572) target = $region56
      $region55: #{tpu_custom_call.1} parent=5 // pred_region
        %s576 = ssub.s32 %s33, 1
        %s577 = sand.u32 %s135, 1
        %s578 = scalar_lea.sflag [#allocation4], %s577
        %s579 = sand.u32 %s135, 1
        %s580 = smul.addr %s579, 16
        %s581 = scalar_lea.vmem [#allocation3], %s580
        // Predicated region
        $region57: #{tpu_custom_call.1} parent=55 // pred_check
          %p582 = pneg %p148
        $region58: #{tpu_custom_call.1} parent=55 // pred_check_branch
          %584 = sbr.rel (%p582) target = $region60
        $region59: #{tpu_custom_call.1} parent=55 // pred_region
          %586 = dma.done %s578, 256
        $region60: #{tpu_custom_call.1} parent=55 // pred_fallthru
          _
        %s587 = sand.u32 %s38, 1
        %s588 = scalar_lea.sflag [#allocation7], %s587
        %s589 = sand.u32 %s165, 1
        %s590 = smul.addr %s589, 16
        %s591 = scalar_lea.vmem [#allocation6], %s590
        // Predicated region
        $region61: #{tpu_custom_call.1} parent=55 // pred_check
          %p592 = pneg %p178
        $region62: #{tpu_custom_call.1} parent=55 // pred_check_branch
          %594 = sbr.rel (%p592) target = $region64
        $region63: #{tpu_custom_call.1} parent=55 // pred_region
          %596 = dma.done %s588, 256
        $region64: #{tpu_custom_call.1} parent=55 // pred_fallthru
          _
        %s597 = sand.u32 %s38, 1
        %s598 = scalar_lea.sflag [#allocation7], %s597
        %s599 = sand.u32 %s217, 1
        %s600 = smul.addr %s599, 16
        %s601 = scalar_lea.vmem [#allocation8], %s600
        // Predicated region
        $region65: #{tpu_custom_call.1} parent=55 // pred_check
          %p602 = pneg %p230
        $region66: #{tpu_custom_call.1} parent=55 // pred_check_branch
          %604 = sbr.rel (%p602) target = $region68
        $region67: #{tpu_custom_call.1} parent=55 // pred_region
          %606 = dma.done %s598, 256
        $region68: #{tpu_custom_call.1} parent=55 // pred_fallthru
          _
        %s607 = sand.u32 %s243, 1
        %s608 = scalar_lea.sflag [#allocation10], %s607
        %s609 = sand.u32 %s243, 1
        %s610 = smul.addr %s609, 16
        %s611 = scalar_lea.vmem [#allocation9], %s610
        // Predicated region
        $region69: #{tpu_custom_call.1} parent=55 // pred_check
          %p612 = pneg %p256
        $region70: #{tpu_custom_call.1} parent=55 // pred_check_branch
          %614 = sbr.rel (%p612) target = $region72
        $region71: #{tpu_custom_call.1} parent=55 // pred_region
          %616 = dma.done %s608, 256
        $region72: #{tpu_custom_call.1} parent=55 // pred_fallthru
          _
        %s617 = ssub.s32 3, %s45
        %p618 = scmp.lt.s32.totalorder %s617, 3
        %s619 = scalar_select %p618, %s617, 3
        %p620 = scmp.lt.s32.totalorder %s43, 1
        %s621 = scalar_select %p620, %s43, 1
        %p622 = scmp.lt.s32.totalorder %s44, 0
        %s623 = scalar_select %p622, %s44, 0
        %s624 = smul.addr %s621, 4
        %s625 = sadd.s32 %s623, %s624
        %s626 = smul.addr %s619, 8
        %s627 = sadd.s32 %s625, %s626
        %s628 = smul.addr %s627, 8
        %s629 = scalar_lea.vmem %s0, %s628
        %p630 = pneg %p84
        %p631 = pneg %p81
        %s632 = ssub.s32 3, %s45
        %p633 = scmp.lt.s32.totalorder %s632, 3
        %s634 = scalar_select %p633, %s632, 3
        %p635 = scmp.lt.s32.totalorder %s43, 1
        %s636 = scalar_select %p635, %s43, 1
        %p637 = scmp.lt.s32.totalorder %s44, 0
        %s638 = scalar_select %p637, %s44, 0
        %s639 = smul.addr %s636, 2
        %s640 = sadd.s32 %s638, %s639
        %s641 = smul.addr %s634, 4
        %s642 = sadd.s32 %s640, %s641
        %s643 = smul.addr %s642, 8
        %s644 = scalar_lea.vmem %s1, %s643
        %p645 = pneg %p116
        %p646 = pneg %p113
        %s647 = sand.u32 %s135, 1
        %s648 = scalar_lea.sflag [#allocation4], %s647
        %s649 = sand.u32 %s135, 1
        %s650 = smul.addr %s649, 16
        %s651 = scalar_lea.vmem [#allocation3], %s650
        %p652 = pneg %p148
        %p653 = pneg %p145
        %s654 = sand.u32 %s38, 1
        %s655 = scalar_lea.sflag [#allocation7], %s654
        %s656 = sand.u32 %s165, 1
        %s657 = smul.addr %s656, 16
        %s658 = scalar_lea.vmem [#allocation6], %s657
        %p659 = pneg %p178
        %p660 = pneg %p175
        %p661 = scmp.lt.s32.totalorder %s45, 3
        %s662 = scalar_select %p661, %s45, 3
        %s663 = smul.addr %s662, 2
        %s664 = smul.addr %s663, 8
        %s665 = scalar_lea.vmem %s4, %s664
        %p666 = pneg %p204
        %p667 = pneg %p201
        %s668 = sand.u32 %s38, 1
        %s669 = scalar_lea.sflag [#allocation7], %s668
        %s670 = sand.u32 %s217, 1
        %s671 = smul.addr %s670, 16
        %s672 = scalar_lea.vmem [#allocation8], %s671
        %p673 = pneg %p230
        %p674 = pneg %p227
        %s675 = sand.u32 %s243, 1
        %s676 = scalar_lea.sflag [#allocation10], %s675
        %s677 = sand.u32 %s243, 1
        %s678 = smul.addr %s677, 16
        %s679 = scalar_lea.vmem [#allocation9], %s678
        %p680 = pneg %p256
        %p681 = pneg %p253
        %p682 = scmp.lt.s32.totalorder %s45, 3
        %s683 = scalar_select %p682, %s45, 3
        %s684 = smul.addr %s683, 4
        %s685 = smul.addr %s684, 8
        %s686 = scalar_lea.vmem %s7, %s685
        %p687 = pneg %p282
        %p688 = pneg %p279
        %p689 = scmp.lt.s32.totalorder %s45, 3
        %s690 = scalar_select %p689, %s45, 3
        %s691 = smul.addr %s690, 8
        %s692 = smul.addr %s691, 8
        %s693 = scalar_lea.vmem %s8, %s692
        %p694 = pneg %p308
        %p695 = pneg %p305
        %p696 = pneg %p338
        %p697 = pneg %p335
        %s698 = sand.u32 %s325, 1
        %s699 = scalar_lea.sflag [#allocation5], %s698
        %s700 = sand.u32 %s325, 1
        %s701 = smul.addr %s700, 16
        %s702 = scalar_lea.vmem [#allocation11], %s701
        %p703 = pneg %p368
        %p704 = pneg %p365
        %s705 = sand.u32 %s38, 1
        %s706 = scalar_lea.sflag [#allocation13], %s705
        %s707 = sand.u32 %s355, 1
        %s708 = smul.addr %s707, 16
        %s709 = scalar_lea.vmem [#allocation12], %s708
        %p710 = pneg %p398
        %p711 = pneg %p395
        %s712 = sand.u32 %s38, 1
        %s713 = scalar_lea.sflag [#allocation13], %s712
        %s714 = sand.u32 %s385, 1
        %s715 = smul.addr %s714, 16
        %s716 = scalar_lea.vmem [#allocation14], %s715
        %s717 = ssub.s32 3, %s45
        %p718 = scmp.lt.s32.totalorder %s717, 3
        %s719 = scalar_select %p718, %s717, 3
        %p720 = scmp.lt.s32.totalorder %s43, 1
        %s721 = scalar_select %p720, %s43, 1
        %p722 = scmp.lt.s32.totalorder %s44, 0
        %s723 = scalar_select %p722, %s44, 0
        %s724 = smul.addr %s721, 4
        %s725 = sadd.s32 %s723, %s724
        %s726 = smul.addr %s719, 8
        %s727 = sadd.s32 %s725, %s726
        %s728 = smul.addr %s727, 8
        %s729 = scalar_lea.vmem %s0, %s728
        %s730 = ssub.s32 3, %s45
        %s731 = ssub.s32 3, %s45
        %p732 = scmp.lt.s32.totalorder %s731, 3
        %s733 = scalar_select %p732, %s731, 3
        %p734 = scmp.lt.s32.totalorder %s43, 1
        %s735 = scalar_select %p734, %s43, 1
        %p736 = scmp.lt.s32.totalorder %s44, 0
        %s737 = scalar_select %p736, %s44, 0
        %s738 = smul.addr %s735, 2
        %s739 = sadd.s32 %s737, %s738
        %s740 = smul.addr %s733, 4
        %s741 = sadd.s32 %s739, %s740
        %s742 = smul.addr %s741, 8
        %s743 = scalar_lea.vmem %s1, %s742
        %s744 = ssub.s32 3, %s45
        %s745 = ssub.s32 3, %s45
        %p746 = scmp.lt.s32.totalorder %s45, 3
        %s747 = scalar_select %p746, %s45, 3
        %s748 = smul.addr %s747, 2
        %s749 = smul.addr %s748, 8
        %s750 = scalar_lea.vmem %s4, %s749
        %p751 = scmp.lt.s32.totalorder %s45, 3
        %s752 = scalar_select %p751, %s45, 3
        %s753 = smul.addr %s752, 4
        %s754 = smul.addr %s753, 8
        %s755 = scalar_lea.vmem %s7, %s754
        %p756 = scmp.lt.s32.totalorder %s45, 3
        %s757 = scalar_select %p756, %s45, 3
        %s758 = smul.addr %s757, 8
        %s759 = smul.addr %s758, 8
        %s760 = scalar_lea.vmem %s8, %s759
        %p761 = scmp.eq.s32.totalorder %s45, 0
        // Predicated region
        $region73: #{tpu_custom_call.1} parent=55 // pred_check
          %p762 = pneg %p761
        $region74: #{tpu_custom_call.1} parent=55 // pred_check_branch
          %764 = sbr.rel (%p762) target = $region76
        $region75: #{tpu_custom_call.1} parent=55 // pred_region
          %vm765 = vcmask 261120
          %766 = vst.msk [vmem:[#allocation2] sm:$0xff] %vm765, 0.0
          %767 = vst.msk [vmem:[#allocation2 + $0x8] sm:$0xff] %vm765, 0.0
        $region76: #{tpu_custom_call.1} parent=55 // pred_fallthru
          _
        %v768 = vld [vmem:[%s760] sm:$0xff]
        %v769 = vld [vmem:[%s760 + $0x8] sm:$0xff]
        %v770 = vld [vmem:[%s760 + $0x10] sm:$0xff]
        %v771 = vld [vmem:[%s760 + $0x18] sm:$0xff]
        %v772 = vld [vmem:[%s760 + $0x20] sm:$0xff]
        %v773 = vld [vmem:[%s760 + $0x28] sm:$0xff]
        %v774 = vld [vmem:[%s760 + $0x30] sm:$0xff]
        %v775 = vld [vmem:[%s760 + $0x38] sm:$0xff]
        %v776 = vld [vmem:[%s729] sm:$0xff]
        %v777 = vld [vmem:[%s729 + $0x8] sm:$0xff]
        %v778 = vld [vmem:[%s729 + $0x10] sm:$0xff]
        %v779 = vld [vmem:[%s729 + $0x18] sm:$0xff]
        %v780 = vld [vmem:[%s750] sm:$0xff]
        %v781 = vld [vmem:[%s750 + $0x8] sm:$0xff]
        %v782 = vld [vmem:[%s601] sm:$0xff]
        %v783 = vld [vmem:[%s601 + $0x8] sm:$0xff]
        %v784 = vld [vmem:[#allocation2] sm:$0xff]
        %v785 = vld [vmem:[#allocation2 + $0x8] sm:$0xff]
        %vm786 = vcmask 130048
        %v788 = vsel %vm786, %v782, 0
        %v791 = vsel %vm786, %v783, 0
        %793 = vmatpush.msra.mxu0 0.0
        %794 = vmatpush.msra.mxu0 0.0
        %795 = vmatpush.msra.mxu0 0.0
        %796 = vmatpush.msra.mxu0 0.0
        %797 = vmatpush.msra.mxu0 0.0
        %798 = vmatpush.msra.mxu0 0.0
        %799 = vmatpush.msra.mxu0 0.0
        %800 = vmatpush.msra.mxu0 0.0
        %801 = vmatpush.msra.mxu0 0.0
        %802 = vmatpush.msra.mxu0 0.0
        %803 = vmatpush.msra.mxu0 0.0
        %804 = vmatpush.msra.mxu0 0.0
        %805 = vmatpush.msra.mxu0 0.0
        %806 = vmatpush.msra.mxu0 0.0
        %807 = vmatpush.msra.mxu0 %v785
        %808 = vmatpush.msra.mxu0 %v784
        %809 = vmatmul.f32.gmra.mxu0 %v788
        %v810 = vpop.f32.mrf.mxu0
        %v811 = vadd.f32 0.0, %v810
        %812 = vmatmul.f32.gmra.mxu0 %v791
        %v813 = vpop.f32.mrf.mxu0
        %v814 = vadd.f32 0.0, %v813
        %815 = vdwg.mxu0
        %vm816 = vcmask 261120
        %v818 = vsel %vm816, %v780, 0
        %v821 = vsel %vm816, %v781, 0
        %823 = vmatpush.msra.mxu0 0.0
        %824 = vmatpush.msra.mxu0 0.0
        %825 = vmatpush.msra.mxu0 0.0
        %826 = vmatpush.msra.mxu0 0.0
        %827 = vmatpush.msra.mxu0 0.0
        %828 = vmatpush.msra.mxu0 0.0
        %829 = vmatpush.msra.mxu0 0.0
        %830 = vmatpush.msra.mxu0 0.0
        %831 = vmatpush.msra.mxu0 0.0
        %832 = vmatpush.msra.mxu0 0.0
        %833 = vmatpush.msra.mxu0 0.0
        %834 = vmatpush.msra.mxu0 0.0
        %835 = vmatpush.msra.mxu0 %v779
        %836 = vmatpush.msra.mxu0 %v778
        %837 = vmatpush.msra.mxu0 %v777
        %838 = vmatpush.msra.mxu0 %v776
        %839 = vmatmul.f32.gmra.mxu0 %v818
        %v840 = vpop.f32.mrf.mxu0
        %v841 = vadd.f32 %v811, %v840
        %842 = vmatmul.f32.gmra.mxu0 %v821
        %v843 = vpop.f32.mrf.mxu0
        %v844 = vadd.f32 %v814, %v843
        %845 = vdwg.mxu0
        %847 = vset.pattern.permute.xlu0 0
        %848 = vperm.xlu0 %847, %v768
        %v849 = vpop.permute.xlu0 %848
        %852 = vset.pattern.permute.xlu0 0
        %853 = vperm.xlu0 %852, %v769
        %v854 = vpop.permute.xlu0 %853
        %v856 = vadd.f32 %v841, %v849
        %v857 = vadd.f32 %v844, %v854
        %v858 = vld [vmem:[%s611] sm:$0xff]
        %v859 = vld [vmem:[%s611 + $0x8] sm:$0xff]
        %861 = vset.pattern.permute.xlu0 0
        %862 = vperm.xlu0 %861, %v770
        %v863 = vpop.permute.xlu0 %862
        %866 = vset.pattern.permute.xlu0 0
        %867 = vperm.xlu0 %866, %v771
        %v868 = vpop.permute.xlu0 %867
        %v871 = vsel %vm786, %v858, 0
        %v874 = vsel %vm786, %v859, 0
        %876 = vmatpush.msra.mxu0 0.0
        %877 = vmatpush.msra.mxu0 0.0
        %878 = vmatpush.msra.mxu0 0.0
        %879 = vmatpush.msra.mxu0 0.0
        %880 = vmatpush.msra.mxu0 0.0
        %881 = vmatpush.msra.mxu0 0.0
        %882 = vmatpush.msra.mxu0 0.0
        %883 = vmatpush.msra.mxu0 0.0
        %884 = vmatpush.msra.mxu0 0.0
        %885 = vmatpush.msra.mxu0 0.0
        %886 = vmatpush.msra.mxu0 0.0
        %887 = vmatpush.msra.mxu0 0.0
        %888 = vmatpush.msra.mxu0 0.0
        %889 = vmatpush.msra.mxu0 0.0
        %890 = vmatpush.msra.mxu0 %v857
        %891 = vmatpush.msra.mxu0 %v856
        %892 = vmatmul.f32.gmra.mxu0 %v871
        %v893 = vpop.f32.mrf.mxu0
        %v894 = vadd.f32 %v863, %v893
        %895 = vmatmul.f32.gmra.mxu0 %v874
        %v896 = vpop.f32.mrf.mxu0
        %v897 = vadd.f32 %v868, %v896
        %898 = vdwg.mxu0
        %v899 = vmax.f32 %v894, 0.0
        %v900 = vmax.f32 %v897, 0.0
        %v901 = vld [vmem:[%s755] sm:$0xff]
        %v902 = vld [vmem:[%s755 + $0x8] sm:$0xff]
        %v903 = vld [vmem:[%s755 + $0x10] sm:$0xff]
        %v904 = vld [vmem:[%s755 + $0x18] sm:$0xff]
        %906 = vset.pattern.permute.xlu0 0
        %907 = vperm.xlu0 %906, %v772
        %v908 = vpop.permute.xlu0 %907
        %911 = vset.pattern.permute.xlu0 0
        %912 = vperm.xlu0 %911, %v773
        %v913 = vpop.permute.xlu0 %912
        %916 = vset.pattern.permute.xlu0 0
        %917 = vperm.xlu0 %916, %v774
        %v918 = vpop.permute.xlu0 %917
        %921 = vset.pattern.permute.xlu0 0
        %922 = vperm.xlu0 %921, %v775
        %v923 = vpop.permute.xlu0 %922
        %v926 = vsel %vm786, %v901, 0
        %v929 = vsel %vm786, %v902, 0
        %v932 = vsel %vm786, %v903, 0
        %v935 = vsel %vm786, %v904, 0
        %937 = vmatpush.msra.mxu0 0.0
        %938 = vmatpush.msra.mxu0 0.0
        %939 = vmatpush.msra.mxu0 0.0
        %940 = vmatpush.msra.mxu0 0.0
        %941 = vmatpush.msra.mxu0 0.0
        %942 = vmatpush.msra.mxu0 0.0
        %943 = vmatpush.msra.mxu0 0.0
        %944 = vmatpush.msra.mxu0 0.0
        %945 = vmatpush.msra.mxu0 0.0
        %946 = vmatpush.msra.mxu0 0.0
        %947 = vmatpush.msra.mxu0 0.0
        %948 = vmatpush.msra.mxu0 0.0
        %949 = vmatpush.msra.mxu0 0.0
        %950 = vmatpush.msra.mxu0 0.0
        %951 = vmatpush.msra.mxu0 %v900
        %952 = vmatpush.msra.mxu0 %v899
        %953 = vmatmul.f32.gmra.mxu0 %v926
        %v954 = vpop.f32.mrf.mxu0
        %v955 = vadd.f32 %v908, %v954
        %956 = vmatmul.f32.gmra.mxu0 %v929
        %v957 = vpop.f32.mrf.mxu0
        %v958 = vadd.f32 %v913, %v957
        %959 = vmatmul.f32.gmra.mxu0 %v932
        %v960 = vpop.f32.mrf.mxu0
        %v961 = vadd.f32 %v918, %v960
        %962 = vmatmul.f32.gmra.mxu0 %v935
        %v963 = vpop.f32.mrf.mxu0
        %v964 = vadd.f32 %v923, %v963
        %965 = vdwg.mxu0
        %v966 = vmin.f32 %v955, 10.0
        %v967 = vmin.f32 %v958, 10.0
        %v968 = vmin.f32 %v961, 10.0
        %v969 = vmin.f32 %v964, 10.0
        %v970 = vmul.f32 %v968, 1.442695
        %v971 = vpow.pop %v970
        %v972 = vmul.f32 %v969, 1.442695
        %v973 = vpow.pop %v972
        %v974 = vadd.f32 %v971, 0.001
        %v975 = vadd.f32 %v973, 0.001
        %v976 = vmul.f32 %v974, %v974
        %v977 = vmul.f32 %v975, %v975
        %v978 = vrcp.pop %v976
        %v979 = vmul.f32 %v976, %v978
        %v980 = vsub.f32 1.0, %v979
        %v981 = vmul.f32 %v978, %v980
        %v982 = vadd.f32 %v978, %v981
        %vm983 = vweird.f32 %v976
        %vm984 = vweird.f32 %v978
        %vm985 = vmor %vm983, %vm984
        %v986 = vsel %vm985, %v978, %v982
        %v987 = vand.u32 2147483647, %v976
        %vm988 = vcmp.eq.f32.partialorder %v987, 8.507059e+37
        %v989 = vand.u32 %v976, 2147483648
        %v990 = vor.u32 1.1754944e-38, %v989
        %v991 = vsel %vm988, %v990, %v986
        %v992 = vmul.f32 1.0, %v991
        %v993 = vrcp.pop %v977
        %v994 = vmul.f32 %v977, %v993
        %v995 = vsub.f32 1.0, %v994
        %v996 = vmul.f32 %v993, %v995
        %v997 = vadd.f32 %v993, %v996
        %vm998 = vweird.f32 %v977
        %vm999 = vweird.f32 %v993
        %vm1000 = vmor %vm998, %vm999
        %v1001 = vsel %vm1000, %v993, %v997
        %v1002 = vand.u32 2147483647, %v977
        %vm1003 = vcmp.eq.f32.partialorder %v1002, 8.507059e+37
        %v1004 = vand.u32 %v977, 2147483648
        %v1005 = vor.u32 1.1754944e-38, %v1004
        %v1006 = vsel %vm1003, %v1005, %v1001
        %v1007 = vmul.f32 1.0, %v1006
        %v1008 = vld [vmem:[%s581] sm:$0xff]
        %v1009 = vld [vmem:[%s581 + $0x8] sm:$0xff]
        %v1010 = vmul.f32 %v1008, %v1008
        %v1011 = vmul.f32 %v1009, %v1009
        %v1012 = vrcp.pop %v1010
        %v1013 = vmul.f32 %v1010, %v1012
        %v1014 = vsub.f32 1.0, %v1013
        %v1015 = vmul.f32 %v1012, %v1014
        %v1016 = vadd.f32 %v1012, %v1015
        %vm1017 = vweird.f32 %v1010
        %vm1018 = vweird.f32 %v1012
        %vm1019 = vmor %vm1017, %vm1018
        %v1020 = vsel %vm1019, %v1012, %v1016
        %v1021 = vand.u32 2147483647, %v1010
        %vm1022 = vcmp.eq.f32.partialorder %v1021, 8.507059e+37
        %v1023 = vand.u32 %v1010, 2147483648
        %v1024 = vor.u32 1.1754944e-38, %v1023
        %v1025 = vsel %vm1022, %v1024, %v1020
        %v1026 = vmul.f32 1.0, %v1025
        %v1027 = vrcp.pop %v1011
        %v1028 = vmul.f32 %v1011, %v1027
        %v1029 = vsub.f32 1.0, %v1028
        %v1030 = vmul.f32 %v1027, %v1029
        %v1031 = vadd.f32 %v1027, %v1030
        %vm1032 = vweird.f32 %v1011
        %vm1033 = vweird.f32 %v1027
        %vm1034 = vmor %vm1032, %vm1033
        %v1035 = vsel %vm1034, %v1027, %v1031
        %v1036 = vand.u32 2147483647, %v1011
        %vm1037 = vcmp.eq.f32.partialorder %v1036, 8.507059e+37
        %v1038 = vand.u32 %v1011, 2147483648
        %v1039 = vor.u32 1.1754944e-38, %v1038
        %v1040 = vsel %vm1037, %v1039, %v1035
        %v1041 = vmul.f32 1.0, %v1040
        %v1042 = vadd.f32 %v992, %v1026
        %v1043 = vadd.f32 %v1007, %v1041
        %v1044 = vadd.f32 %v1042, 0.001
        %v1045 = vadd.f32 %v1043, 0.001
        %v1046 = vrcp.pop %v1044
        %v1047 = vmul.f32 %v1044, %v1046
        %v1048 = vsub.f32 1.0, %v1047
        %v1049 = vmul.f32 %v1046, %v1048
        %v1050 = vadd.f32 %v1046, %v1049
        %vm1051 = vweird.f32 %v1044
        %vm1052 = vweird.f32 %v1046
        %vm1053 = vmor %vm1051, %vm1052
        %v1054 = vsel %vm1053, %v1046, %v1050
        %v1055 = vand.u32 2147483647, %v1044
        %vm1056 = vcmp.eq.f32.partialorder %v1055, 8.507059e+37
        %v1057 = vand.u32 %v1044, 2147483648
        %v1058 = vor.u32 1.1754944e-38, %v1057
        %v1059 = vsel %vm1056, %v1058, %v1054
        %v1060 = vmul.f32 1.0, %v1059
        %v1061 = vrcp.pop %v1045
        %v1062 = vmul.f32 %v1045, %v1061
        %v1063 = vsub.f32 1.0, %v1062
        %v1064 = vmul.f32 %v1061, %v1063
        %v1065 = vadd.f32 %v1061, %v1064
        %vm1066 = vweird.f32 %v1045
        %vm1067 = vweird.f32 %v1061
        %vm1068 = vmor %vm1066, %vm1067
        %v1069 = vsel %vm1068, %v1061, %v1065
        %v1070 = vand.u32 2147483647, %v1045
        %vm1071 = vcmp.eq.f32.partialorder %v1070, 8.507059e+37
        %v1072 = vand.u32 %v1045, 2147483648
        %v1073 = vor.u32 1.1754944e-38, %v1072
        %v1074 = vsel %vm1071, %v1073, %v1069
        %v1075 = vmul.f32 1.0, %v1074
        %v1076 = vmul.f32 %v966, %v992
        %v1077 = vmul.f32 %v967, %v1007
        %v1078 = vld [vmem:[%s743] sm:$0xff]
        %v1079 = vld [vmem:[%s743 + $0x8] sm:$0xff]
        %v1080 = vmul.f32 %v1078, %v1026
        %v1081 = vmul.f32 %v1079, %v1041
        %v1082 = vadd.f32 %v1076, %v1080
        %v1083 = vadd.f32 %v1077, %v1081
        %v1084 = vmul.f32 %v1060, %v1082
        %v1085 = vmul.f32 %v1075, %v1083
        %v1086 = vld [vmem:[%s591] sm:$0xff]
        %v1087 = vld [vmem:[%s591 + $0x8] sm:$0xff]
        %v1088 = vmul.f32 %v1086, %v1060
        %v1089 = vmul.f32 %v1087, %v1075
        %v1090 = vadd.f32 %v1084, %v1088
        %v1091 = vadd.f32 %v1085, %v1089
        %1092 = vst.msk [vmem:[#allocation2] sm:$0xff] %vm816, %v1090
        %1093 = vst.msk [vmem:[#allocation2 + $0x8] sm:$0xff] %vm816, %v1091
        %1094 = vst.msk [vmem:[%s702] sm:$0xff] %vm816, %v1090
        %1095 = vst.msk [vmem:[%s702 + $0x8] sm:$0xff] %vm816, %v1091
        %1096 = vst.msk [vmem:[%s709] sm:$0xff] %vm816, %v1084
        %1097 = vst.msk [vmem:[%s709 + $0x8] sm:$0xff] %vm816, %v1085
        %1098 = vst.msk [vmem:[%s716] sm:$0xff] %vm816, %v1060
        %1099 = vst.msk [vmem:[%s716 + $0x8] sm:$0xff] %vm816, %v1075
        %s1100 = sand.u32 %s325, 1
        %s1101 = scalar_lea.sflag [#allocation5], %s1100
        %s1102 = sand.u32 %s325, 1
        %s1103 = smul.addr %s1102, 16
        %s1104 = scalar_lea.vmem [#allocation11], %s1103
        %s1105 = sand.u32 %s38, 1
        %s1106 = scalar_lea.sflag [#allocation13], %s1105
        %s1107 = sand.u32 %s355, 1
        %s1108 = smul.addr %s1107, 16
        %s1109 = scalar_lea.vmem [#allocation12], %s1108
        %s1110 = sand.u32 %s38, 1
        %s1111 = scalar_lea.sflag [#allocation13], %s1110
        %s1112 = sand.u32 %s385, 1
        %s1113 = smul.addr %s1112, 16
        %s1114 = scalar_lea.vmem [#allocation14], %s1113
        // Predicated region
        $region77: #{tpu_custom_call.1} parent=55 // pred_check
          %p1115 = pneg %p335
        $region78: #{tpu_custom_call.1} parent=55 // pred_check_branch
          %1117 = sbr.rel (%p1115) target = $region80
        $region79: #{tpu_custom_call.1} parent=55 // pred_region
          %1119 = vsyncadd %s1101, 0
          %s1120 = smul.addr %s43, 2
          %s1121 = sadd.s32 %s44, %s1120
          %s1122 = smul.addr %s45, 4
          %s1123 = sadd.s32 %s1121, %s1122
          %s1124 = smul.addr %s1123, 8
          %s1125 = scalar_lea.hbm %s9, %s1124
          %s1126 = sshll.u32 %s1104, 4
          %s1127 = int_to_ptr.vmem [resolvable:$true] %s1126
          %s1128 = sshll.u32 %s1125, 4
          %s1129 = int_to_ptr.hbm [resolvable:$true] %s1128
          %1134 = dma.vmem_to_hbm [thread:$0]  %s1127, 256, %s1129, %s1101, 128, 128, 8
        $region80: #{tpu_custom_call.1} parent=55 // pred_fallthru
          _
        // Predicated region
        $region81: #{tpu_custom_call.1} parent=55 // pred_check
          %p1135 = pneg %p365
        $region82: #{tpu_custom_call.1} parent=55 // pred_check_branch
          %1137 = sbr.rel (%p1135) target = $region84
        $region83: #{tpu_custom_call.1} parent=55 // pred_region
          %1139 = vsyncadd %s1106, 0
          %s1140 = smul.addr %s43, 2
          %s1141 = sadd.s32 %s44, %s1140
          %s1142 = smul.addr %s45, 4
          %s1143 = sadd.s32 %s1141, %s1142
          %s1144 = smul.addr %s1143, 8
          %s1145 = scalar_lea.hbm %s10, %s1144
          %s1146 = sshll.u32 %s1109, 4
          %s1147 = int_to_ptr.vmem [resolvable:$true] %s1146
          %s1148 = sshll.u32 %s1145, 4
          %s1149 = int_to_ptr.hbm [resolvable:$true] %s1148
          %1154 = dma.vmem_to_hbm [thread:$0]  %s1147, 256, %s1149, %s1106, 128, 128, 8
        $region84: #{tpu_custom_call.1} parent=55 // pred_fallthru
          _
        // Predicated region
        $region85: #{tpu_custom_call.1} parent=55 // pred_check
          %p1155 = pneg %p395
        $region86: #{tpu_custom_call.1} parent=55 // pred_check_branch
          %1157 = sbr.rel (%p1155) target = $region88
        $region87: #{tpu_custom_call.1} parent=55 // pred_region
          %1159 = vsyncadd %s1111, 0
          %s1160 = smul.addr %s43, 2
          %s1161 = sadd.s32 %s44, %s1160
          %s1162 = smul.addr %s45, 4
          %s1163 = sadd.s32 %s1161, %s1162
          %s1164 = smul.addr %s1163, 8
          %s1165 = scalar_lea.hbm %s11, %s1164
          %s1166 = sshll.u32 %s1114, 4
          %s1167 = int_to_ptr.vmem [resolvable:$true] %s1166
          %s1168 = sshll.u32 %s1165, 4
          %s1169 = int_to_ptr.hbm [resolvable:$true] %s1168
          %1174 = dma.vmem_to_hbm [thread:$0]  %s1167, 256, %s1169, %s1111, 128, 128, 8
        $region88: #{tpu_custom_call.1} parent=55 // pred_fallthru
          _
      $region56: #{tpu_custom_call.1} parent=5 // pred_fallthru
        _
      %p1175 = scmp.le.s32.totalorder 2, %s33
      // Predicated region
      $region89: #{tpu_custom_call.1} parent=5 // pred_check
        %p1176 = pneg %p1175
      $region90: #{tpu_custom_call.1} parent=5 // pred_check_branch
        %1178 = sbr.rel (%p1176) target = $region92
      $region91: #{tpu_custom_call.1} parent=5 // pred_region
        %s1179 = ssub.s32 %s33, 2
        // Predicated region
        $region93: #{tpu_custom_call.1} parent=91 // pred_check
          %p1180 = pneg %p341
        $region94: #{tpu_custom_call.1} parent=91 // pred_check_branch
          %1182 = sbr.rel (%p1180) target = $region96
        $region95: #{tpu_custom_call.1} parent=91 // pred_region
          %s1183 = sand.u32 %s326, 1
          %s1184 = scalar_lea.sflag [#allocation5], %s1183
          %s1185 = sand.u32 %s326, 1
          %s1186 = smul.addr %s1185, 16
          %s1187 = scalar_lea.vmem [#allocation11], %s1186
          %1189 = dma.done %s1184, 256
        $region96: #{tpu_custom_call.1} parent=91 // pred_fallthru
          _
        // Predicated region
        $region97: #{tpu_custom_call.1} parent=91 // pred_check
          %p1190 = pneg %p371
        $region98: #{tpu_custom_call.1} parent=91 // pred_check_branch
          %1192 = sbr.rel (%p1190) target = $region100
        $region99: #{tpu_custom_call.1} parent=91 // pred_region
          %s1193 = sand.u32 %s39, 1
          %s1194 = scalar_lea.sflag [#allocation13], %s1193
          %s1195 = sand.u32 %s356, 1
          %s1196 = smul.addr %s1195, 16
          %s1197 = scalar_lea.vmem [#allocation12], %s1196
          %1199 = dma.done %s1194, 256
        $region100: #{tpu_custom_call.1} parent=91 // pred_fallthru
          _
        // Predicated region
        $region101: #{tpu_custom_call.1} parent=91 // pred_check
          %p1200 = pneg %p401
        $region102: #{tpu_custom_call.1} parent=91 // pred_check_branch
          %1202 = sbr.rel (%p1200) target = $region104
        $region103: #{tpu_custom_call.1} parent=91 // pred_region
          %s1203 = sand.u32 %s39, 1
          %s1204 = scalar_lea.sflag [#allocation13], %s1203
          %s1205 = sand.u32 %s386, 1
          %s1206 = smul.addr %s1205, 16
          %s1207 = scalar_lea.vmem [#allocation14], %s1206
          %1209 = dma.done %s1204, 256
        $region104: #{tpu_custom_call.1} parent=91 // pred_fallthru
          _
      $region92: #{tpu_custom_call.1} parent=5 // pred_fallthru
        _
    $region6: #{tpu_custom_call.1} parent=1 // loop_footer
      %s37 = sadd.s32 1, %s33
    $region7: #{tpu_custom_call.1} parent=1 // loop_footer_branch
      %32 = sbr.rel target = $region3
    $region8: #{tpu_custom_call.1} parent=1 // loop_exit
      _
    %1210 = vsyncpa [#allocation4], 1
    %s1211 = scalar_lea.sflag [#allocation4], 1
    %1212 = vsyncpa %s1211, 1
    %1213 = vsyncpa [#allocation7], 1
    %s1214 = scalar_lea.sflag [#allocation7], 1
    %1215 = vsyncpa %s1214, 1
    %1216 = vsyncpa [#allocation10], 1
    %s1217 = scalar_lea.sflag [#allocation10], 1
    %1218 = vsyncpa %s1217, 1
    %1219 = vsyncpa [#allocation5], 1
    %s1220 = scalar_lea.sflag [#allocation5], 1
    %1221 = vsyncpa %s1220, 1
    %1222 = vsyncpa [#allocation13], 1
    %s1223 = scalar_lea.sflag [#allocation13], 1
    %1224 = vsyncpa %s1223, 1

</llo_original>
